<compile_context>
chip_gen: v5e
topology: v5e:2x2
jax: 0.10.0
libtpu: 0.0.40
codegen_flags: <defaults>
</compile_context>

<pallas_src>
import jax
import jax.numpy as jnp
from jax.experimental import pallas as pl
from jax.experimental.pallas import tpu as pltpu

NEG_BIG = -1e30  # finite stand-in for -inf (keeps exp/max arithmetic NaN-free)


def _round_up(x, m):
    return ((x + m - 1) // m) * m


# ----------------------------------------------------------------------------
# Kernel 1: per-point 2-layer MLP (Conv1d(k=1)+BN+ReLU, x2) for the lab/B side.
# (The ext/A side MLP is fused into the attention kernel below.)
# ----------------------------------------------------------------------------
def _pointwise_mlp2_kernel(x_ref, w1_ref, b1_ref, w2_ref, b2_ref, o_ref):
    x = x_ref[...].astype(jnp.bfloat16)                                # [tn, Cin]
    h = jnp.dot(x, w1_ref[...], preferred_element_type=jnp.float32) + b1_ref[...]
    h = jnp.maximum(h, 0.0)                                            # [tn, C1] f32
    o = jnp.dot(h.astype(jnp.bfloat16), w2_ref[...],
                preferred_element_type=jnp.float32) + b2_ref[...]
    o_ref[...] = jnp.maximum(o, 0.0).astype(o_ref.dtype)               # [tn, C2]


def pointwise_mlp2(x, w1, b1, w2, b2, *, max_tile=512):
    n, c_in = x.shape
    c1 = w1.shape[1]
    c2 = w2.shape[1]
    tile = min(max_tile, _round_up(n, 8))
    n_pad = _round_up(n, tile)
    if n_pad != n:
        x = jnp.pad(x, ((0, n_pad - n), (0, 0)))
    out = pl.pallas_call(
        _pointwise_mlp2_kernel,
        out_shape=jax.ShapeDtypeStruct((n_pad, c2), jnp.float32),
        grid_spec=pltpu.PrefetchScalarGridSpec(
            num_scalar_prefetch=0,
            grid=(n_pad // tile,),
            in_specs=[
                pl.BlockSpec((tile, c_in), lambda i: (i, 0)),
                pl.BlockSpec((c_in, c1), lambda i: (0, 0)),
                pl.BlockSpec((1, c1), lambda i: (0, 0)),
                pl.BlockSpec((c1, c2), lambda i: (0, 0)),
                pl.BlockSpec((1, c2), lambda i: (0, 0)),
            ],
            out_specs=pl.BlockSpec((tile, c2), lambda i: (i, 0)),
        ),
        compiler_params=pltpu.CompilerParams(
            dimension_semantics=("parallel",)),
    )(x, w1, b1, w2, b2)
    return out[:n]


# ----------------------------------------------------------------------------
# Kernel 2: fused [convs1 + pairwise-diff attention + fc]
#   a        = convs1(ext_tile)                       (computed once per i-tile)
#   diff     = a[i,:] - b[j,:]          over an N2 chunk
#   w        = SharedMLP(diff)          (hiddens padded 32/64 -> 128 lanes)
#   wei      = softmax over N2          (flash-style online accumulation)
#   att      = sum_j wei * diff
#   out      = att @ W_fc + b_fc        (output padded 13 -> 128 lanes)
# ----------------------------------------------------------------------------
def _fused_attention_kernel(n2_ref,
                            x_ref, b_ref,
                            c1w1_ref, c1b1_ref, c1w2_ref, c1b2_ref,
                            mw1_ref, mb1_ref, mw2_ref, mb2_ref, mw3_ref, mb3_ref,
                            fcw_ref, fcb_ref,
                            o_ref,
                            a_sc, m_sc, l_sc, acc_sc):
    j = pl.program_id(1)
    nj = pl.num_programs(1)
    ti, c = a_sc.shape
    tj = b_ref.shape[0]

    # --- once per i-tile: convs1 MLP of the ext features + accumulator init
    @pl.when(j == 0)
    def _init():
        x = x_ref[...].astype(jnp.bfloat16)                            # [ti, 352]
        h = jnp.dot(x, c1w1_ref[...],
                    preferred_element_type=jnp.float32) + c1b1_ref[...]
        h = jnp.maximum(h, 0.0)                                        # [ti, 512]
        a = jnp.dot(h.astype(jnp.bfloat16), c1w2_ref[...],
                    preferred_element_type=jnp.float32) + c1b2_ref[...]
        a_sc[...] = jnp.maximum(a, 0.0)                                # [ti, 256]
        m_sc[...] = jnp.full_like(m_sc, NEG_BIG)
        l_sc[...] = jnp.zeros_like(l_sc)
        acc_sc[...] = jnp.zeros_like(acc_sc)

    # --- pairwise differences against this N2 chunk (f32 VPU work)
    a = a_sc[...]                                                      # [ti, C]
    b = b_ref[...]                                                     # [tj, C]
    diff = a[:, None, :] - b[None, :, :]                               # [ti, tj, C]

    # --- wei_conv SharedMLP, bf16 MXU inputs, 128-lane padded hiddens
    d2 = diff.reshape(ti * tj, c).astype(jnp.bfloat16)
    h = jnp.dot(d2, mw1_ref[...], preferred_element_type=jnp.float32) + mb1_ref[...]
    h = jnp.maximum(h, 0.0)                                            # [ti*tj, 128]
    h = jnp.dot(h.astype(jnp.bfloat16), mw2_ref[...],
                preferred_element_type=jnp.float32) + mb2_ref[...]
    h = jnp.maximum(h, 0.0)                                            # [ti*tj, 128]
    w = jnp.dot(h.astype(jnp.bfloat16), mw3_ref[...],
                preferred_element_type=jnp.float32) + mb3_ref[...]
    w = jnp.maximum(w, 0.0).reshape(ti, tj, c)                         # [ti, tj, C]

    # --- mask padded lab rows (global j index >= true N2, from SMEM scalar)
    n2 = n2_ref[0]
    col = jax.lax.broadcasted_iota(jnp.int32, (1, tj, 1), 1) + j * tj
    w = jnp.where(col < n2, w, NEG_BIG)

    # --- flash-style online softmax over N2, per (point, channel)
    m_prev = m_sc[...]
    m_new = jnp.maximum(m_prev, jnp.max(w, axis=1))                    # [ti, C]
    alpha = jnp.exp(m_prev - m_new)
    p = jnp.exp(w - m_new[:, None, :])                                 # [ti, tj, C]
    l_sc[...] = alpha * l_sc[...] + jnp.sum(p, axis=1)
    acc_sc[...] = alpha * acc_sc[...] + jnp.sum(p * diff, axis=1)
    m_sc[...] = m_new

    # --- finalize: normalize (EUP reciprocal) + fc, lane-dense store
    @pl.when(j == nj - 1)
    def _finalize():
        att = acc_sc[...] * pl.reciprocal(l_sc[...], approx=True)      # [ti, C]
        out = jnp.dot(att.astype(jnp.bfloat16), fcw_ref[...],
                      preferred_element_type=jnp.float32) + fcb_ref[...]
        o_ref[...] = out.astype(o_ref.dtype)


def fused_attention_ext(ext_fea, b_fea, params, *, out_c,
                        max_tile_i=128, max_tile_j=16):
    """ext_fea: [N1, 352] raw features; b_fea: [N2, 256] = convs2(lab_fea)."""
    n1, c_in = ext_fea.shape
    n2, c = b_fea.shape

    # Tile choice keeps the [ti, tj, 256] f32 intermediates (diff/w/p) plus
    # double-buffered bf16 weights well under v7x's 64 MiB VMEM (~16 MiB here).
    tile_i = min(max_tile_i, _round_up(n1, 8))
    tile_j = min(max_tile_j, _round_up(n2, 8))
    n1_pad = _round_up(n1, tile_i)
    n2_pad = _round_up(n2, tile_j)
    if n1_pad != n1:
        ext_fea = jnp.pad(ext_fea, ((0, n1_pad - n1), (0, 0)))
    if n2_pad != n2:
        b_fea = jnp.pad(b_fea, ((0, n2_pad - n2), (0, 0)))
    n2_smem = jnp.array([n2], dtype=jnp.int32)

    c_out_pad = params["fc_w"].shape[1]
    full = lambda i, j, n2s: (0, 0)

    out = pl.pallas_call(
        _fused_attention_kernel,
        out_shape=jax.ShapeDtypeStruct((n1_pad, c_out_pad), jnp.float32),
        grid_spec=pltpu.PrefetchScalarGridSpec(
            num_scalar_prefetch=1,
            grid=(n1_pad // tile_i, n2_pad // tile_j),
            in_specs=[
                pl.BlockSpec((tile_i, c_in), lambda i, j, n2s: (i, 0)),
                pl.BlockSpec((tile_j, c), lambda i, j, n2s: (j, 0)),
                pl.BlockSpec(params["c1_w1"].shape, full),
                pl.BlockSpec(params["c1_b1"].shape, full),
                pl.BlockSpec(params["c1_w2"].shape, full),
                pl.BlockSpec(params["c1_b2"].shape, full),
                pl.BlockSpec(params["m_w1"].shape, full),
                pl.BlockSpec(params["m_b1"].shape, full),
                pl.BlockSpec(params["m_w2"].shape, full),
                pl.BlockSpec(params["m_b2"].shape, full),
                pl.BlockSpec(params["m_w3"].shape, full),
                pl.BlockSpec(params["m_b3"].shape, full),
                pl.BlockSpec(params["fc_w"].shape, full),
                pl.BlockSpec(params["fc_b"].shape, full),
            ],
            out_specs=pl.BlockSpec((tile_i, c_out_pad),
                                   lambda i, j, n2s: (i, 0)),
            scratch_shapes=[
                pltpu.VMEM((tile_i, c), jnp.float32),   # a (convs1 output)
                pltpu.VMEM((tile_i, c), jnp.float32),   # running max
                pltpu.VMEM((tile_i, c), jnp.float32),   # running denominator
                pltpu.VMEM((tile_i, c), jnp.float32),   # running weighted sum
            ],
        ),
        compiler_params=pltpu.CompilerParams(
            dimension_semantics=("parallel", "arbitrary"),
            vmem_limit_bytes=48 * 1024 * 1024,
        ),
    )(n2_smem, ext_fea, b_fea,
      params["c1_w1"], params["c1_b1"], params["c1_w2"], params["c1_b2"],
      params["m_w1"], params["m_b1"], params["m_w2"], params["m_b2"],
      params["m_w3"], params["m_b3"], params["fc_w"], params["fc_b"])
    return out[:n1, :out_c]


# ----------------------------------------------------------------------------
# Parameter setup (deterministic, synthetic) + BN folding + lane padding glue
# ----------------------------------------------------------------------------
HID_PAD = 128   # 32/64-wide attention-MLP hiddens padded to a full 128-lane pass
OUT_PAD = 128   # 13-wide fc output padded lane-dense (sliced in the wrapper)


def _fold_bn(w, b, gamma, beta, mean, var, eps=1e-5):
    scale = gamma / jnp.sqrt(var + eps)
    return w * scale[None, :], (b - mean) * scale + beta


def _make_conv_bn(key, c_in, c_out, *, pad_in=None, pad_out=None, scale=0.05):
    kw, kb, kg, kbe = jax.random.split(key, 4)
    w = scale * jax.random.normal(kw, (c_in, c_out), jnp.float32)
    b = scale * jax.random.normal(kb, (c_out,), jnp.float32)
    gamma = 1.0 + 0.1 * jax.random.normal(kg, (c_out,), jnp.float32)
    beta = 0.1 * jax.random.normal(kbe, (c_out,), jnp.float32)
    mean = jnp.zeros((c_out,), jnp.float32)
    var = jnp.ones((c_out,), jnp.float32)
    wf, bf = _fold_bn(w, b, gamma, beta, mean, var)
    pin = pad_in or c_in
    pout = pad_out or c_out
    wp = jnp.zeros((pin, pout), jnp.float32).at[:c_in, :c_out].set(wf)
    bp = jnp.zeros((1, pout), jnp.float32).at[:, :c_out].set(bf)
    return wp.astype(jnp.bfloat16), bp                                  # bf16 w, f32 b


def _make_linear(key, c_in, c_out, *, pad_out=None, scale=0.05):
    kw, kb = jax.random.split(key, 2)
    w = scale * jax.random.normal(kw, (c_in, c_out), jnp.float32)
    b = scale * jax.random.normal(kb, (c_out,), jnp.float32)
    pout = pad_out or c_out
    wp = jnp.zeros((c_in, pout), jnp.float32).at[:, :c_out].set(w)
    bp = jnp.zeros((1, pout), jnp.float32).at[:, :c_out].set(b)
    return wp.astype(jnp.bfloat16), bp


def init_params(key, *, in_c=352, out_c=13):
    keys = jax.random.split(key, 8)
    p = {}
    # convs1: 352 -> 512 -> 256   (fused into the attention kernel)
    p["c1_w1"], p["c1_b1"] = _make_conv_bn(keys[0], in_c, 512)
    p["c1_w2"], p["c1_b2"] = _make_conv_bn(keys[1], 512, 256)
    # convs2: 352 -> 512 -> 256   (standalone B-side kernel)
    p["c2_w1"], p["c2_b1"] = _make_conv_bn(keys[2], in_c, 512)
    p["c2_w2"], p["c2_b2"] = _make_conv_bn(keys[3], 512, 256)
    # wei_conv SharedMLP [256, 32, 64, 256], bn=True, ReLU on each layer.
    # Hidden widths zero-padded to 128 lanes (exact: padded lanes stay 0).
    p["m_w1"], p["m_b1"] = _make_conv_bn(keys[4], 256, 32, pad_out=HID_PAD)
    p["m_w2"], p["m_b2"] = _make_conv_bn(keys[5], 32, 64, pad_in=HID_PAD, pad_out=HID_PAD)
    p["m_w3"], p["m_b3"] = _make_conv_bn(keys[6], 64, 256, pad_in=HID_PAD)
    # fc: Linear(256, out_c), output columns padded to 128 lanes.
    p["fc_w"], p["fc_b"] = _make_linear(keys[7], 256, out_c, pad_out=OUT_PAD)
    return p


def attention_ext_module(params, ext_fea, lab_fea, *, out_c=13):
    """ext_fea: [N1, 352], lab_fea: [N2, 352]  ->  [N1, out_c]."""
    b = pointwise_mlp2(lab_fea, params["c2_w1"], params["c2_b1"],
                       params["c2_w2"], params["c2_b2"])               # [N2, 256]
    return fused_attention_ext(ext_fea, b, params, out_c=out_c)        # [N1, out_c]


# ----------------------------------------------------------------------------
# Pure-JAX reference (same eval-mode-BN-folded, bf16-matmul semantics)
# ----------------------------------------------------------------------------
def _mm(x, w_bf16):
    return jnp.dot(x.astype(jnp.bfloat16), w_bf16,
                   preferred_element_type=jnp.float32)


def reference(params, ext_fea, lab_fea, *, out_c):
    relu = lambda t: jnp.maximum(t, 0.0)
    p = params
    a = relu(_mm(relu(_mm(ext_fea, p["c1_w1"]) + p["c1_b1"]), p["c1_w2"]) + p["c1_b2"])
    b = relu(_mm(relu(_mm(lab_fea, p["c2_w1"]) + p["c2_b1"]), p["c2_w2"]) + p["c2_b2"])
    n1, c = a.shape
    n2 = b.shape[0]
    diff = a[:, None, :] - b[None, :, :]                               # [N1, N2, 256]
    d2 = diff.reshape(n1 * n2, c)
    h = relu(_mm(d2, p["m_w1"]) + p["m_b1"])
    h = relu(_mm(h, p["m_w2"]) + p["m_b2"])
    w = relu(_mm(h, p["m_w3"]) + p["m_b3"]).reshape(n1, n2, c)
    wei = jax.nn.softmax(w, axis=1)                                    # softmax over N2
    att = jnp.sum(wei * diff, axis=1)                                  # [N1, 256]
    out = _mm(att, p["fc_w"]) + p["fc_b"]
    return out[:, :out_c]


if __name__ == "__main__":
    key = jax.random.PRNGKey(0)
    k_params, k_ext, k_lab = jax.random.split(key, 3)

    # Channel sizes fixed by the module; point counts kept small and
    # deliberately NOT tile-aligned to exercise padding + softmax masking.
    N1, N2, C_IN, OUT_C = 200, 50, 352, 13
    ext_fea = jax.random.normal(k_ext, (N1, C_IN), jnp.float32)
    lab_fea = jax.random.normal(k_lab, (N2, C_IN), jnp.float32)

    params = init_params(k_params, in_c=C_IN, out_c=OUT_C)

    out = attention_ext_module(params, ext_fea, lab_fea, out_c=OUT_C)
    out = jax.block_until_ready(out)
    assert out.shape == (N1, OUT_C), out.shape

    ref = jax.block_until_ready(reference(params, ext_fea, lab_fea, out_c=OUT_C))
    max_err = float(jnp.max(jnp.abs(out - ref)))
    assert jnp.allclose(out, ref, rtol=2e-2, atol=2e-2), max_err

    print("KERNEL_OK")
</pallas_src>

<mosaic_0001>
module attributes {stable_mosaic.version = 11 : i64} {
  func.func @_pointwise_mlp2_kernel(%arg0: i32, %arg1: memref<56x352xf32, #tpu.memory_space<vmem>>, %arg2: memref<352x512xbf16, #tpu.memory_space<vmem>>, %arg3: memref<1x512xf32, #tpu.memory_space<vmem>>, %arg4: memref<512x256xbf16, #tpu.memory_space<vmem>>, %arg5: memref<1x256xf32, #tpu.memory_space<vmem>>, %arg6: memref<56x256xf32, #tpu.memory_space<vmem>>) attributes {dimension_semantics = [#tpu.dimension_semantics<parallel>], iteration_bounds = array<i64: 1>, scalar_prefetch = 0 : i64, scratch_operands = 0 : i64, tpu.core_type = #tpu.core_type<tc>, window_params = [{transform_indices = @transform_0, window_bounds = array<i64: 56, 352>}, {pipeline_mode = #tpu.pipeline_mode<synchronous>, transform_indices = @transform_1, window_bounds = array<i64: 352, 512>}, {pipeline_mode = #tpu.pipeline_mode<synchronous>, transform_indices = @transform_2, window_bounds = array<i64: 1, 512>}, {pipeline_mode = #tpu.pipeline_mode<synchronous>, transform_indices = @transform_3, window_bounds = array<i64: 512, 256>}, {pipeline_mode = #tpu.pipeline_mode<synchronous>, transform_indices = @transform_4, window_bounds = array<i64: 1, 256>}, {transform_indices = @transform_5, window_bounds = array<i64: 56, 256>}]} {
    %c0 = arith.constant 0 : index
    %c0_0 = arith.constant 0 : index
    %0 = vector.load %arg1[%c0, %c0_0] : memref<56x352xf32, #tpu.memory_space<vmem>>, vector<56x352xf32>
    %1 = arith.truncf %0 : vector<56x352xf32> to vector<56x352xbf16>
    %c0_1 = arith.constant 0 : index
    %c0_2 = arith.constant 0 : index
    %2 = vector.load %arg2[%c0_1, %c0_2] : memref<352x512xbf16, #tpu.memory_space<vmem>>, vector<352x512xbf16>
    %cst = arith.constant dense<0.000000e+00> : vector<56x512xf32>
    %3 = tpu.matmul %1, %2, %cst {dimension_numbers = #tpu.dot_dimension_numbers<[1], [0], [0], [1], [0, 0, 1, 1], [], []>} : vector<56x352xbf16>, vector<352x512xbf16>, vector<56x512xf32> -> vector<56x512xf32>
    %c0_3 = arith.constant 0 : index
    %c0_4 = arith.constant 0 : index
    %4 = vector.load %arg3[%c0_3, %c0_4] : memref<1x512xf32, #tpu.memory_space<vmem>>, vector<1x512xf32>
    %5 = vector.broadcast %4 : vector<1x512xf32> to vector<56x512xf32>
    %6 = arith.addf %3, %5 : vector<56x512xf32>
    %cst_5 = arith.constant 0.000000e+00 : f32
    %7 = vector.broadcast %cst_5 : f32 to vector<56x512xf32>
    %8 = arith.maximumf %6, %7 : vector<56x512xf32>
    %9 = arith.truncf %8 : vector<56x512xf32> to vector<56x512xbf16>
    %c0_6 = arith.constant 0 : index
    %c0_7 = arith.constant 0 : index
    %10 = vector.load %arg4[%c0_6, %c0_7] : memref<512x256xbf16, #tpu.memory_space<vmem>>, vector<512x256xbf16>
    %cst_8 = arith.constant dense<0.000000e+00> : vector<56x256xf32>
    %11 = tpu.matmul %9, %10, %cst_8 {dimension_numbers = #tpu.dot_dimension_numbers<[1], [0], [0], [1], [0, 0, 1, 1], [], []>} : vector<56x512xbf16>, vector<512x256xbf16>, vector<56x256xf32> -> vector<56x256xf32>
    %c0_9 = arith.constant 0 : index
    %c0_10 = arith.constant 0 : index
    %12 = vector.load %arg5[%c0_9, %c0_10] : memref<1x256xf32, #tpu.memory_space<vmem>>, vector<1x256xf32>
    %13 = vector.broadcast %12 : vector<1x256xf32> to vector<56x256xf32>
    %14 = arith.addf %11, %13 : vector<56x256xf32>
    %cst_11 = arith.constant 0.000000e+00 : f32
    %15 = vector.broadcast %cst_11 : f32 to vector<56x256xf32>
    %16 = arith.maximumf %14, %15 : vector<56x256xf32>
    %c0_12 = arith.constant 0 : index
    %c0_13 = arith.constant 0 : index
    %17 = vector.load %arg6[%c0_12, %c0_13] : memref<56x256xf32, #tpu.memory_space<vmem>>, vector<56x256xf32>
    tpu.vector_store %arg6[%c0_12, %c0_13], %16 {strides = array<i32>} : memref<56x256xf32, #tpu.memory_space<vmem>>, vector<56x256xf32>,
    return
  }
  func.func @transform_0(%arg0: i32) -> (i32, i32) {
    %c0_i32 = arith.constant 0 : i32
    %c0_i32_0 = arith.constant 0 : i32
    return %arg0, %c0_i32 : i32, i32
  }
  func.func @transform_1(%arg0: i32) -> (i32, i32) {
    %c0_i32 = arith.constant 0 : i32
    %c0_i32_0 = arith.constant 0 : i32
    %c0_i32_1 = arith.constant 0 : i32
    return %c0_i32, %c0_i32_0 : i32, i32
  }
  func.func @transform_2(%arg0: i32) -> (i32, i32) {
    %c0_i32 = arith.constant 0 : i32
    %c0_i32_0 = arith.constant 0 : i32
    %c0_i32_1 = arith.constant 0 : i32
    return %c0_i32, %c0_i32_0 : i32, i32
  }
  func.func @transform_3(%arg0: i32) -> (i32, i32) {
    %c0_i32 = arith.constant 0 : i32
    %c0_i32_0 = arith.constant 0 : i32
    %c0_i32_1 = arith.constant 0 : i32
    return %c0_i32, %c0_i32_0 : i32, i32
  }
  func.func @transform_4(%arg0: i32) -> (i32, i32) {
    %c0_i32 = arith.constant 0 : i32
    %c0_i32_0 = arith.constant 0 : i32
    %c0_i32_1 = arith.constant 0 : i32
    return %c0_i32, %c0_i32_0 : i32, i32
  }
  func.func @transform_5(%arg0: i32) -> (i32, i32) {
    %c0_i32 = arith.constant 0 : i32
    %c0_i32_0 = arith.constant 0 : i32
    return %arg0, %c0_i32 : i32, i32
  }
}

</mosaic_0001>

<llo_original>
// kernel: tpu_custom_call.1
$region0: #{tpu_custom_call.1}
  #allocation0 [shape = 'u32[]', space=smem, size = 0x4, offset = 0x4, fixed_abs, tag = 'smem constant byte address 0x4 - core index']
  #allocation1 [shape = 'u32[72,128]{1,0:T(1,128)}', space=vmem, size = 0x9000, scoped, tag = 'internal scratch']
  %s0 = inlined_call_operand.hbm [shape: f32[56,352], index: 0, kind: input, shape index: {}]
  %s1 = inlined_call_operand.hbm [shape: bf16[352,512], index: 1, kind: input, shape index: {}]
  %s2 = inlined_call_operand.hbm [shape: f32[1,512], index: 2, kind: input, shape index: {}]
  %s3 = inlined_call_operand.hbm [shape: bf16[512,256], index: 3, kind: input, shape index: {}]
  %s4 = inlined_call_operand.vmem [shape: f32[1,256], index: 4, kind: input, shape index: {}]
  %s5 = inlined_call_operand.hbm [shape: f32[56,256], index: 5, kind: output, shape index: {}]
  %s6 = sld [smem:[#allocation0]]
  $region46: #{tpu_custom_call.1} parent=0
    _
  %s8 = ssub.s32 1, %s6
  %s9 = scalar_select 0, %s8, %s6
  $region1: #{tpu_custom_call.1} parent=0
    #allocation2 [shape = 'u8[86016]{0}', space=vmem, size = 0x15000, scoped, tag = 'input window, operand 0, single buffered']
    #allocation3 [shape = 's32[1]{0}', space=sflag, size = 0x4, scoped, tag = 'scoped memory for tpu_custom_call.1']
    #allocation4 [shape = 's32[1]{0}', space=sflag, size = 0x4, scoped, tag = 'scoped memory for tpu_custom_call.1']
    #allocation5 [shape = 'u8[360448]{0}', space=vmem, size = 0x58000, scoped, tag = 'input window, operand 1, single buffered']
    #allocation6 [shape = 's32[1]{0}', space=sflag, size = 0x4, scoped, tag = 'scoped memory for tpu_custom_call.1']
    #allocation7 [shape = 'u8[2048]{0}', space=vmem, size = 0x800, scoped, tag = 'input window, operand 2, single buffered']
    #allocation8 [shape = 'u8[262144]{0}', space=vmem, size = 0x40000, scoped, tag = 'input window, operand 3, single buffered']
    #allocation9 [shape = 's32[1]{0}', space=sflag, size = 0x4, scoped, tag = 'scoped memory for tpu_custom_call.1']
    #allocation10 [shape = 'u8[57344]{0}', space=vmem, size = 0xe000, scoped, tag = 'output window, operand 0, single buffered']
    %10 = vsyncpa [#allocation3], 0
    %11 = vsyncpa [#allocation6], 0
    %12 = vsyncpa [#allocation9], 0
    %13 = vsyncpa [#allocation4], 0
    // Predicated region
    $region2: #{tpu_custom_call.1} parent=1 // pred_check
      _
    $region3: #{tpu_custom_call.1} parent=1 // pred_check_branch
      %15 = sbr.rel (0) target = $region5
    $region4: #{tpu_custom_call.1} parent=1 // pred_region
      %17 = vsyncadd [#allocation3], 0
      %s18 = sshll.u32 %s0, 4
      %s19 = int_to_ptr.hbm [resolvable:$true] %s18
      %s20 = sshll.u32 [#allocation2], 4
      %s21 = int_to_ptr.vmem [resolvable:$true] %s20
      %26 = dma.hbm_to_vmem [thread:$0]  %s19, 2688, %s21, [#allocation3], 384, 384, 24
    $region5: #{tpu_custom_call.1} parent=1 // pred_fallthru
      _
    // Predicated region
    $region6: #{tpu_custom_call.1} parent=1 // pred_check
      _
    $region7: #{tpu_custom_call.1} parent=1 // pred_check_branch
      %28 = sbr.rel (0) target = $region9
    $region8: #{tpu_custom_call.1} parent=1 // pred_region
      %30 = vsyncadd [#allocation6], 0
      %s31 = sshll.u32 %s1, 4
      %s32 = int_to_ptr.hbm [resolvable:$true] %s31
      %s33 = sshll.u32 [#allocation5], 4
      %s34 = int_to_ptr.vmem [resolvable:$true] %s33
      %39 = dma.hbm_to_vmem [thread:$0]  %s32, 11264, %s34, [#allocation6], 256, 256, 16
    $region9: #{tpu_custom_call.1} parent=1 // pred_fallthru
      _
    // Predicated region
    $region10: #{tpu_custom_call.1} parent=1 // pred_check
      _
    $region11: #{tpu_custom_call.1} parent=1 // pred_check_branch
      %41 = sbr.rel (0) target = $region13
    $region12: #{tpu_custom_call.1} parent=1 // pred_region
      %43 = vsyncadd [#allocation6], 0
      %s45 = sshll.u32 %s2, 4
      %s46 = int_to_ptr.hbm [resolvable:$true] %s45
      %s47 = sshll.u32 [#allocation7], 4
      %s48 = int_to_ptr.vmem [resolvable:$true] %s47
      %50 = dma.hbm_to_vmem [thread:$0]  %s46, 64, %s48, [#allocation6]
    $region13: #{tpu_custom_call.1} parent=1 // pred_fallthru
      _
    // Predicated region
    $region14: #{tpu_custom_call.1} parent=1 // pred_check
      _
    $region15: #{tpu_custom_call.1} parent=1 // pred_check_branch
      %52 = sbr.rel (0) target = $region17
    $region16: #{tpu_custom_call.1} parent=1 // pred_region
      %54 = vsyncadd [#allocation9], 0
      %s55 = sshll.u32 %s3, 4
      %s56 = int_to_ptr.hbm [resolvable:$true] %s55
      %s57 = sshll.u32 [#allocation8], 4
      %s58 = int_to_ptr.vmem [resolvable:$true] %s57
      %63 = dma.hbm_to_vmem [thread:$0]  %s56, 8192, %s58, [#allocation9], 128, 128, 8
    $region17: #{tpu_custom_call.1} parent=1 // pred_fallthru
      _
    // Predicated region
    $region18: #{tpu_custom_call.1} parent=1 // pred_check
      _
    $region19: #{tpu_custom_call.1} parent=1 // pred_check_branch
      %65 = sbr.rel (0) target = $region21
    $region20: #{tpu_custom_call.1} parent=1 // pred_region
      _
    $region21: #{tpu_custom_call.1} parent=1 // pred_fallthru
      _
    // Predicated region
    $region22: #{tpu_custom_call.1} parent=1 // pred_check
      _
    $region23: #{tpu_custom_call.1} parent=1 // pred_check_branch
      %67 = sbr.rel (0) target = $region25
    $region24: #{tpu_custom_call.1} parent=1 // pred_region
      %69 = dma.done [#allocation3], 2688
    $region25: #{tpu_custom_call.1} parent=1 // pred_fallthru
      _
    // Predicated region
    $region26: #{tpu_custom_call.1} parent=1 // pred_check
      _
    $region27: #{tpu_custom_call.1} parent=1 // pred_check_branch
      %71 = sbr.rel (0) target = $region29
    $region28: #{tpu_custom_call.1} parent=1 // pred_region
      %73 = dma.done [#allocation6], 11264
    $region29: #{tpu_custom_call.1} parent=1 // pred_fallthru
      _
    // Predicated region
    $region30: #{tpu_custom_call.1} parent=1 // pred_check
      _
    $region31: #{tpu_custom_call.1} parent=1 // pred_check_branch
      %75 = sbr.rel (0) target = $region33
    $region32: #{tpu_custom_call.1} parent=1 // pred_region
      %77 = dma.done [#allocation6], 64
    $region33: #{tpu_custom_call.1} parent=1 // pred_fallthru
      _
    // Predicated region
    $region34: #{tpu_custom_call.1} parent=1 // pred_check
      _
    $region35: #{tpu_custom_call.1} parent=1 // pred_check_branch
      %79 = sbr.rel (0) target = $region37
    $region36: #{tpu_custom_call.1} parent=1 // pred_region
      %81 = dma.done [#allocation9], 8192
    $region37: #{tpu_custom_call.1} parent=1 // pred_fallthru
      _
    %v83 = vld [vmem:[#allocation2] sm:$0xff]
    %v84 = vld [vmem:[#allocation2 + $0x8] sm:$0xff]
    %v85 = vld [vmem:[#allocation2 + $0x10] sm:$0xff]
    %v86 = vld [vmem:[#allocation2 + $0x18] sm:$0xff]
    %v87 = vld [vmem:[#allocation2 + $0x20] sm:$0xff]
    %v88 = vld [vmem:[#allocation2 + $0x28] sm:$0xff]
    %v89 = vld [vmem:[#allocation2 + $0x30] sm:$0xff]
    %v90 = vld [vmem:[#allocation2 + $0x38] sm:$0xff]
    %v91 = vld [vmem:[#allocation2 + $0x40] sm:$0xff]
    %v92 = vld [vmem:[#allocation2 + $0x48] sm:$0xff]
    %v93 = vld [vmem:[#allocation2 + $0x50] sm:$0xff]
    %v94 = vld [vmem:[#allocation2 + $0x58] sm:$0xff]
    %v95 = vld [vmem:[#allocation2 + $0x60] sm:$0xff]
    %v96 = vld [vmem:[#allocation2 + $0x68] sm:$0xff]
    %v97 = vld [vmem:[#allocation2 + $0x70] sm:$0xff]
    %v98 = vld [vmem:[#allocation2 + $0x78] sm:$0xff]
    %v99 = vld [vmem:[#allocation2 + $0x80] sm:$0xff]
    %v100 = vld [vmem:[#allocation2 + $0x88] sm:$0xff]
    %v101 = vld [vmem:[#allocation2 + $0x90] sm:$0xff]
    %v102 = vld [vmem:[#allocation2 + $0x98] sm:$0xff]
    %v103 = vld [vmem:[#allocation2 + $0xa0] sm:$0xff]
    %v104 = vpack.c.bf16 %v86, %v83
    %v105 = vpack.c.bf16 %v87, %v84
    %v106 = vpack.c.bf16 %v88, %v85
    %v107 = vpack.c.bf16 %v92, %v89
    %v108 = vpack.c.bf16 %v93, %v90
    %v109 = vpack.c.bf16 %v94, %v91
    %v110 = vpack.c.bf16 %v98, %v95
    %v111 = vpack.c.bf16 %v99, %v96
    %v112 = vpack.c.bf16 %v100, %v97
    %v113 = vpack.c.bf16 %v101, %v101
    %v114 = vpack.c.bf16 %v102, %v102
    %v115 = vpack.c.bf16 %v103, %v103
    %v116 = vld [vmem:[#allocation5] sm:$0xff]
    %v117 = vld [vmem:[#allocation5 + $0x8] sm:$0xff]
    %v118 = vld [vmem:[#allocation5 + $0x10] sm:$0xff]
    %v119 = vld [vmem:[#allocation5 + $0x18] sm:$0xff]
    %v120 = vld [vmem:[#allocation5 + $0x20] sm:$0xff]
    %v121 = vld [vmem:[#allocation5 + $0x28] sm:$0xff]
    %v122 = vld [vmem:[#allocation5 + $0x30] sm:$0xff]
    %v123 = vld [vmem:[#allocation5 + $0x38] sm:$0xff]
    %v124 = vld [vmem:[#allocation5 + $0x40] sm:$0xff]
    %v125 = vld [vmem:[#allocation5 + $0x48] sm:$0xff]
    %v126 = vld [vmem:[#allocation5 + $0x50] sm:$0xff]
    %v127 = vld [vmem:[#allocation5 + $0x58] sm:$0xff]
    %v128 = vld [vmem:[#allocation5 + $0x60] sm:$0xff]
    %v129 = vld [vmem:[#allocation5 + $0x68] sm:$0xff]
    %v130 = vld [vmem:[#allocation5 + $0x70] sm:$0xff]
    %v131 = vld [vmem:[#allocation5 + $0x78] sm:$0xff]
    %v132 = vld [vmem:[#allocation5 + $0x80] sm:$0xff]
    %v133 = vld [vmem:[#allocation5 + $0x88] sm:$0xff]
    %v134 = vld [vmem:[#allocation5 + $0x90] sm:$0xff]
    %v135 = vld [vmem:[#allocation5 + $0x98] sm:$0xff]
    %v136 = vld [vmem:[#allocation5 + $0xa0] sm:$0xff]
    %v137 = vld [vmem:[#allocation5 + $0xa8] sm:$0xff]
    %v138 = vld [vmem:[#allocation5 + $0xb0] sm:$0xff]
    %v139 = vld [vmem:[#allocation5 + $0xb8] sm:$0xff]
    %v140 = vld [vmem:[#allocation5 + $0xc0] sm:$0xff]
    %v141 = vld [vmem:[#allocation5 + $0xc8] sm:$0xff]
    %v142 = vld [vmem:[#allocation5 + $0xd0] sm:$0xff]
    %v143 = vld [vmem:[#allocation5 + $0xd8] sm:$0xff]
    %v144 = vld [vmem:[#allocation5 + $0xe0] sm:$0xff]
    %v145 = vld [vmem:[#allocation5 + $0xe8] sm:$0xff]
    %v146 = vld [vmem:[#allocation5 + $0xf0] sm:$0xff]
    %v147 = vld [vmem:[#allocation5 + $0xf8] sm:$0xff]
    %v148 = vld [vmem:[#allocation5 + $0x100] sm:$0xff]
    %v149 = vld [vmem:[#allocation5 + $0x108] sm:$0xff]
    %v150 = vld [vmem:[#allocation5 + $0x110] sm:$0xff]
    %v151 = vld [vmem:[#allocation5 + $0x118] sm:$0xff]
    %v152 = vld [vmem:[#allocation5 + $0x120] sm:$0xff]
    %v153 = vld [vmem:[#allocation5 + $0x128] sm:$0xff]
    %v154 = vld [vmem:[#allocation5 + $0x130] sm:$0xff]
    %v155 = vld [vmem:[#allocation5 + $0x138] sm:$0xff]
    %v156 = vld [vmem:[#allocation5 + $0x140] sm:$0xff]
    %v157 = vld [vmem:[#allocation5 + $0x148] sm:$0xff]
    %v158 = vld [vmem:[#allocation5 + $0x150] sm:$0xff]
    %v159 = vld [vmem:[#allocation5 + $0x158] sm:$0xff]
    %v160 = vld [vmem:[#allocation5 + $0x160] sm:$0xff]
    %v161 = vld [vmem:[#allocation5 + $0x168] sm:$0xff]
    %v162 = vld [vmem:[#allocation5 + $0x170] sm:$0xff]
    %v163 = vld [vmem:[#allocation5 + $0x178] sm:$0xff]
    %v164 = vld [vmem:[#allocation5 + $0x180] sm:$0xff]
    %v165 = vld [vmem:[#allocation5 + $0x188] sm:$0xff]
    %v166 = vld [vmem:[#allocation5 + $0x190] sm:$0xff]
    %v167 = vld [vmem:[#allocation5 + $0x198] sm:$0xff]
    %v168 = vld [vmem:[#allocation5 + $0x1a0] sm:$0xff]
    %v169 = vld [vmem:[#allocation5 + $0x1a8] sm:$0xff]
    %v170 = vld [vmem:[#allocation5 + $0x1b0] sm:$0xff]
    %v171 = vld [vmem:[#allocation5 + $0x1b8] sm:$0xff]
    %v172 = vld [vmem:[#allocation5 + $0x1c0] sm:$0xff]
    %v173 = vld [vmem:[#allocation5 + $0x1c8] sm:$0xff]
    %v174 = vld [vmem:[#allocation5 + $0x1d0] sm:$0xff]
    %v175 = vld [vmem:[#allocation5 + $0x1d8] sm:$0xff]
    %v176 = vld [vmem:[#allocation5 + $0x1e0] sm:$0xff]
    %v177 = vld [vmem:[#allocation5 + $0x1e8] sm:$0xff]
    %v178 = vld [vmem:[#allocation5 + $0x1f0] sm:$0xff]
    %v179 = vld [vmem:[#allocation5 + $0x1f8] sm:$0xff]
    %v180 = vld [vmem:[#allocation5 + $0x200] sm:$0xff]
    %v181 = vld [vmem:[#allocation5 + $0x208] sm:$0xff]
    %v182 = vld [vmem:[#allocation5 + $0x210] sm:$0xff]
    %v183 = vld [vmem:[#allocation5 + $0x218] sm:$0xff]
    %v184 = vld [vmem:[#allocation5 + $0x220] sm:$0xff]
    %v185 = vld [vmem:[#allocation5 + $0x228] sm:$0xff]
    %v186 = vld [vmem:[#allocation5 + $0x230] sm:$0xff]
    %v187 = vld [vmem:[#allocation5 + $0x238] sm:$0xff]
    %v188 = vld [vmem:[#allocation5 + $0x240] sm:$0xff]
    %v189 = vld [vmem:[#allocation5 + $0x248] sm:$0xff]
    %v190 = vld [vmem:[#allocation5 + $0x250] sm:$0xff]
    %v191 = vld [vmem:[#allocation5 + $0x258] sm:$0xff]
    %v192 = vld [vmem:[#allocation5 + $0x260] sm:$0xff]
    %v193 = vld [vmem:[#allocation5 + $0x268] sm:$0xff]
    %v194 = vld [vmem:[#allocation5 + $0x270] sm:$0xff]
    %v195 = vld [vmem:[#allocation5 + $0x278] sm:$0xff]
    %v196 = vld [vmem:[#allocation5 + $0x280] sm:$0xff]
    %v197 = vld [vmem:[#allocation5 + $0x288] sm:$0xff]
    %v198 = vld [vmem:[#allocation5 + $0x290] sm:$0xff]
    %v199 = vld [vmem:[#allocation5 + $0x298] sm:$0xff]
    %v200 = vld [vmem:[#allocation5 + $0x2a0] sm:$0xff]
    %v201 = vld [vmem:[#allocation5 + $0x2a8] sm:$0xff]
    %v202 = vld [vmem:[#allocation5 + $0x2b0] sm:$0xff]
    %v203 = vld [vmem:[#allocation5 + $0x2b8] sm:$0xff]
    %v204 = vld [vmem:[#allocation7] sm:$0xf]
    %v206 = vperm.slane %v204, 0
    %v207 = vperm.slane %v204, 1
    %v208 = vperm.slane %v204, 2
    %v209 = vperm.slane %v204, 3
    %v302 = vunpack.c.l.b16 %v116
    %v303 = vunpack.c.h.b16 %v116
    %v304 = vunpack.c.l.b16 %v117
    %v305 = vunpack.c.h.b16 %v117
    %v306 = vunpack.c.l.b16 %v118
    %v307 = vunpack.c.h.b16 %v118
    %v308 = vunpack.c.l.b16 %v119
    %v309 = vunpack.c.h.b16 %v119
    %v310 = vunpack.c.l.b16 %v120
    %v311 = vunpack.c.h.b16 %v120
    %v312 = vunpack.c.l.b16 %v121
    %v313 = vunpack.c.h.b16 %v121
    %v314 = vunpack.c.l.b16 %v122
    %v315 = vunpack.c.h.b16 %v122
    %v316 = vunpack.c.l.b16 %v123
    %v317 = vunpack.c.h.b16 %v123
    %v318 = vunpack.c.l.b16 %v124
    %v319 = vunpack.c.h.b16 %v124
    %v320 = vunpack.c.l.b16 %v125
    %v321 = vunpack.c.h.b16 %v125
    %v322 = vunpack.c.l.b16 %v126
    %v323 = vunpack.c.h.b16 %v126
    %v324 = vunpack.c.l.b16 %v127
    %v325 = vunpack.c.h.b16 %v127
    %v326 = vunpack.c.l.b16 %v128
    %v327 = vunpack.c.h.b16 %v128
    %v328 = vunpack.c.l.b16 %v129
    %v329 = vunpack.c.h.b16 %v129
    %v330 = vunpack.c.l.b16 %v130
    %v331 = vunpack.c.h.b16 %v130
    %v332 = vunpack.c.l.b16 %v131
    %v333 = vunpack.c.h.b16 %v131
    %v334 = vunpack.c.l.b16 %v132
    %v335 = vunpack.c.h.b16 %v132
    %v336 = vunpack.c.l.b16 %v133
    %v337 = vunpack.c.h.b16 %v133
    %v338 = vunpack.c.l.b16 %v134
    %v339 = vunpack.c.h.b16 %v134
    %v340 = vunpack.c.l.b16 %v135
    %v341 = vunpack.c.h.b16 %v135
    %v342 = vunpack.c.l.b16 %v136
    %v343 = vunpack.c.h.b16 %v136
    %v344 = vunpack.c.l.b16 %v137
    %v345 = vunpack.c.h.b16 %v137
    %v346 = vunpack.c.l.b16 %v138
    %v347 = vunpack.c.h.b16 %v138
    %v348 = vunpack.c.l.b16 %v139
    %v349 = vunpack.c.h.b16 %v139
    %v350 = vunpack.c.l.b16 %v140
    %v351 = vunpack.c.h.b16 %v140
    %v352 = vunpack.c.l.b16 %v141
    %v353 = vunpack.c.h.b16 %v141
    %v354 = vunpack.c.l.b16 %v142
    %v355 = vunpack.c.h.b16 %v142
    %v356 = vunpack.c.l.b16 %v143
    %v357 = vunpack.c.h.b16 %v143
    %v358 = vunpack.c.l.b16 %v144
    %v359 = vunpack.c.h.b16 %v144
    %v360 = vunpack.c.l.b16 %v145
    %v361 = vunpack.c.h.b16 %v145
    %v362 = vunpack.c.l.b16 %v146
    %v363 = vunpack.c.h.b16 %v146
    %v364 = vunpack.c.l.b16 %v147
    %v365 = vunpack.c.h.b16 %v147
    %v366 = vunpack.c.l.b16 %v148
    %v367 = vunpack.c.h.b16 %v148
    %v368 = vunpack.c.l.b16 %v149
    %v369 = vunpack.c.h.b16 %v149
    %v370 = vunpack.c.l.b16 %v150
    %v371 = vunpack.c.h.b16 %v150
    %v372 = vunpack.c.l.b16 %v151
    %v373 = vunpack.c.h.b16 %v151
    %v374 = vunpack.c.l.b16 %v152
    %v375 = vunpack.c.h.b16 %v152
    %v376 = vunpack.c.l.b16 %v153
    %v377 = vunpack.c.h.b16 %v153
    %v378 = vunpack.c.l.b16 %v154
    %v379 = vunpack.c.h.b16 %v154
    %v380 = vunpack.c.l.b16 %v155
    %v381 = vunpack.c.h.b16 %v155
    %v382 = vunpack.c.l.b16 %v156
    %v383 = vunpack.c.h.b16 %v156
    %v384 = vunpack.c.l.b16 %v157
    %v385 = vunpack.c.h.b16 %v157
    %v386 = vunpack.c.l.b16 %v158
    %v387 = vunpack.c.h.b16 %v158
    %v388 = vunpack.c.l.b16 %v159
    %v389 = vunpack.c.h.b16 %v159
    %v390 = vunpack.c.l.b16 %v160
    %v391 = vunpack.c.h.b16 %v160
    %v392 = vunpack.c.l.b16 %v161
    %v393 = vunpack.c.h.b16 %v161
    %v394 = vunpack.c.l.b16 %v162
    %v395 = vunpack.c.h.b16 %v162
    %v396 = vunpack.c.l.b16 %v163
    %v397 = vunpack.c.h.b16 %v163
    %v398 = vunpack.c.l.b16 %v164
    %v399 = vunpack.c.h.b16 %v164
    %v400 = vunpack.c.l.b16 %v165
    %v401 = vunpack.c.h.b16 %v165
    %v402 = vunpack.c.l.b16 %v166
    %v403 = vunpack.c.h.b16 %v166
    %v404 = vunpack.c.l.b16 %v167
    %v405 = vunpack.c.h.b16 %v167
    %v406 = vunpack.c.l.b16 %v168
    %v407 = vunpack.c.h.b16 %v168
    %v408 = vunpack.c.l.b16 %v169
    %v409 = vunpack.c.h.b16 %v169
    %v410 = vunpack.c.l.b16 %v170
    %v411 = vunpack.c.h.b16 %v170
    %v412 = vunpack.c.l.b16 %v171
    %v413 = vunpack.c.h.b16 %v171
    %v414 = vunpack.c.l.b16 %v172
    %v415 = vunpack.c.h.b16 %v172
    %v416 = vunpack.c.l.b16 %v173
    %v417 = vunpack.c.h.b16 %v173
    %v418 = vunpack.c.l.b16 %v174
    %v419 = vunpack.c.h.b16 %v174
    %v420 = vunpack.c.l.b16 %v175
    %v421 = vunpack.c.h.b16 %v175
    %v422 = vunpack.c.l.b16 %v176
    %v423 = vunpack.c.h.b16 %v176
    %v424 = vunpack.c.l.b16 %v177
    %v425 = vunpack.c.h.b16 %v177
    %v426 = vunpack.c.l.b16 %v178
    %v427 = vunpack.c.h.b16 %v178
    %v428 = vunpack.c.l.b16 %v179
    %v429 = vunpack.c.h.b16 %v179
    %v430 = vunpack.c.l.b16 %v180
    %v431 = vunpack.c.h.b16 %v180
    %v432 = vunpack.c.l.b16 %v181
    %v433 = vunpack.c.h.b16 %v181
    %v434 = vunpack.c.l.b16 %v182
    %v435 = vunpack.c.h.b16 %v182
    %v436 = vunpack.c.l.b16 %v183
    %v437 = vunpack.c.h.b16 %v183
    %v438 = vunpack.c.l.b16 %v184
    %v439 = vunpack.c.h.b16 %v184
    %v440 = vunpack.c.l.b16 %v185
    %v441 = vunpack.c.h.b16 %v185
    %v442 = vunpack.c.l.b16 %v186
    %v443 = vunpack.c.h.b16 %v186
    %v444 = vunpack.c.l.b16 %v187
    %v445 = vunpack.c.h.b16 %v187
    %v446 = vunpack.c.l.b16 %v188
    %v447 = vunpack.c.h.b16 %v188
    %v448 = vunpack.c.l.b16 %v189
    %v449 = vunpack.c.h.b16 %v189
    %v450 = vunpack.c.l.b16 %v190
    %v451 = vunpack.c.h.b16 %v190
    %v452 = vunpack.c.l.b16 %v191
    %v453 = vunpack.c.h.b16 %v191
    %v454 = vunpack.c.l.b16 %v192
    %v455 = vunpack.c.h.b16 %v192
    %v456 = vunpack.c.l.b16 %v193
    %v457 = vunpack.c.h.b16 %v193
    %v458 = vunpack.c.l.b16 %v194
    %v459 = vunpack.c.h.b16 %v194
    %v460 = vunpack.c.l.b16 %v195
    %v461 = vunpack.c.h.b16 %v195
    %v462 = vunpack.c.l.b16 %v196
    %v463 = vunpack.c.h.b16 %v196
    %v464 = vunpack.c.l.b16 %v197
    %v465 = vunpack.c.h.b16 %v197
    %v466 = vunpack.c.l.b16 %v198
    %v467 = vunpack.c.h.b16 %v198
    %v468 = vunpack.c.l.b16 %v199
    %v469 = vunpack.c.h.b16 %v199
    %v470 = vunpack.c.l.b16 %v200
    %v471 = vunpack.c.h.b16 %v200
    %v472 = vunpack.c.l.b16 %v201
    %v473 = vunpack.c.h.b16 %v201
    %v474 = vunpack.c.l.b16 %v202
    %v475 = vunpack.c.h.b16 %v202
    %v476 = vunpack.c.l.b16 %v203
    %v477 = vunpack.c.h.b16 %v203
    %v478 = vpack.c.b16 %v306, %v302
    %v479 = vpack.c.b16 %v307, %v303
    %v480 = vpack.c.b16 %v308, %v304
    %v481 = vpack.c.b16 %v309, %v305
    %v482 = vpack.c.b16 %v314, %v310
    %v483 = vpack.c.b16 %v315, %v311
    %v484 = vpack.c.b16 %v316, %v312
    %v485 = vpack.c.b16 %v317, %v313
    %v486 = vpack.c.b16 %v322, %v318
    %v487 = vpack.c.b16 %v323, %v319
    %v488 = vpack.c.b16 %v324, %v320
    %v489 = vpack.c.b16 %v325, %v321
    %v490 = vpack.c.b16 %v330, %v326
    %v491 = vpack.c.b16 %v331, %v327
    %v492 = vpack.c.b16 %v332, %v328
    %v493 = vpack.c.b16 %v333, %v329
    %v494 = vpack.c.b16 %v338, %v334
    %v495 = vpack.c.b16 %v339, %v335
    %v496 = vpack.c.b16 %v340, %v336
    %v497 = vpack.c.b16 %v341, %v337
    %v498 = vpack.c.b16 %v346, %v342
    %v499 = vpack.c.b16 %v347, %v343
    %v500 = vpack.c.b16 %v348, %v344
    %v501 = vpack.c.b16 %v349, %v345
    %v502 = vpack.c.b16 %v354, %v350
    %v503 = vpack.c.b16 %v355, %v351
    %v504 = vpack.c.b16 %v356, %v352
    %v505 = vpack.c.b16 %v357, %v353
    %v506 = vpack.c.b16 %v362, %v358
    %v507 = vpack.c.b16 %v363, %v359
    %v508 = vpack.c.b16 %v364, %v360
    %v509 = vpack.c.b16 %v365, %v361
    %v510 = vpack.c.b16 %v370, %v366
    %v511 = vpack.c.b16 %v371, %v367
    %v512 = vpack.c.b16 %v372, %v368
    %v513 = vpack.c.b16 %v373, %v369
    %v514 = vpack.c.b16 %v378, %v374
    %v515 = vpack.c.b16 %v379, %v375
    %v516 = vpack.c.b16 %v380, %v376
    %v517 = vpack.c.b16 %v381, %v377
    %v518 = vpack.c.b16 %v386, %v382
    %v519 = vpack.c.b16 %v387, %v383
    %v520 = vpack.c.b16 %v388, %v384
    %v521 = vpack.c.b16 %v389, %v385
    %v522 = vpack.c.b16 %v394, %v390
    %v523 = vpack.c.b16 %v395, %v391
    %v524 = vpack.c.b16 %v396, %v392
    %v525 = vpack.c.b16 %v397, %v393
    %v526 = vpack.c.b16 %v402, %v398
    %v527 = vpack.c.b16 %v403, %v399
    %v528 = vpack.c.b16 %v404, %v400
    %v529 = vpack.c.b16 %v405, %v401
    %v530 = vpack.c.b16 %v410, %v406
    %v531 = vpack.c.b16 %v411, %v407
    %v532 = vpack.c.b16 %v412, %v408
    %v533 = vpack.c.b16 %v413, %v409
    %v534 = vpack.c.b16 %v418, %v414
    %v535 = vpack.c.b16 %v419, %v415
    %v536 = vpack.c.b16 %v420, %v416
    %v537 = vpack.c.b16 %v421, %v417
    %v538 = vpack.c.b16 %v426, %v422
    %v539 = vpack.c.b16 %v427, %v423
    %v540 = vpack.c.b16 %v428, %v424
    %v541 = vpack.c.b16 %v429, %v425
    %v542 = vpack.c.b16 %v434, %v430
    %v543 = vpack.c.b16 %v435, %v431
    %v544 = vpack.c.b16 %v436, %v432
    %v545 = vpack.c.b16 %v437, %v433
    %v546 = vpack.c.b16 %v442, %v438
    %v547 = vpack.c.b16 %v443, %v439
    %v548 = vpack.c.b16 %v444, %v440
    %v549 = vpack.c.b16 %v445, %v441
    %v550 = vpack.c.b16 %v450, %v446
    %v551 = vpack.c.b16 %v451, %v447
    %v552 = vpack.c.b16 %v452, %v448
    %v553 = vpack.c.b16 %v453, %v449
    %v554 = vpack.c.b16 %v458, %v454
    %v555 = vpack.c.b16 %v459, %v455
    %v556 = vpack.c.b16 %v460, %v456
    %v557 = vpack.c.b16 %v461, %v457
    %v558 = vpack.c.b16 %v466, %v462
    %v559 = vpack.c.b16 %v467, %v463
    %v560 = vpack.c.b16 %v468, %v464
    %v561 = vpack.c.b16 %v469, %v465
    %v562 = vpack.c.b16 %v474, %v470
    %v563 = vpack.c.b16 %v475, %v471
    %v564 = vpack.c.b16 %v476, %v472
    %v565 = vpack.c.b16 %v477, %v473
    %vm654 = vcmask 785408
    %v656 = vsel %vm654, %v106, 0
    %v659 = vsel %vm654, %v109, 0
    %v662 = vsel %vm654, %v112, 0
    %v665 = vsel %vm654, %v115, 0
    %667 = vmatpush.bf16.msra.mxu0 %v506
    %668 = vmatpush.bf16.msra.mxu0 %v502
    %669 = vmatpush.bf16.msra.mxu0 %v498
    %670 = vmatpush.bf16.msra.mxu0 %v494
    %671 = vmatpush.bf16.msra.mxu0 %v490
    %672 = vmatpush.bf16.msra.mxu0 %v486
    %673 = vmatpush.bf16.msra.mxu0 %v482
    %674 = vmatpush.bf16.msra.mxu0 %v478
    %675 = vmatmul.bf16.gmra.mxu0 %v104
    %v676 = vpop.f32.mrf.mxu0
    %v677 = vadd.f32 %v206, %v676
    %v678 = vpop.f32.mrf.mxu0
    %v679 = vadd.f32 %v206, %v678
    %680 = vmatmul.bf16.gmra.mxu0 %v107
    %v681 = vpop.f32.mrf.mxu0
    %v682 = vadd.f32 %v206, %v681
    %v683 = vpop.f32.mrf.mxu0
    %v684 = vadd.f32 %v206, %v683
    %685 = vmatmul.bf16.gmra.mxu0 %v110
    %v686 = vpop.f32.mrf.mxu0
    %v687 = vadd.f32 %v206, %v686
    %v688 = vpop.f32.mrf.mxu0
    %v689 = vadd.f32 %v206, %v688
    %690 = vmatmul.bf16.gmra.mxu0 %v113
    %v691 = vpop.f32.mrf.mxu0
    %v692 = vadd.f32 %v206, %v691
    %v693 = vpop.f32.mrf.mxu0
    %694 = vdwg.mxu0
    %695 = vmatpush.bf16.msra.mxu0 %v538
    %696 = vmatpush.bf16.msra.mxu0 %v534
    %697 = vmatpush.bf16.msra.mxu0 %v530
    %698 = vmatpush.bf16.msra.mxu0 %v526
    %699 = vmatpush.bf16.msra.mxu0 %v522
    %700 = vmatpush.bf16.msra.mxu0 %v518
    %701 = vmatpush.bf16.msra.mxu0 %v514
    %702 = vmatpush.bf16.msra.mxu0 %v510
    %703 = vmatmul.bf16.gmra.mxu0 %v105
    %v704 = vpop.f32.mrf.mxu0
    %v705 = vadd.f32 %v677, %v704
    %v706 = vpop.f32.mrf.mxu0
    %v707 = vadd.f32 %v679, %v706
    %708 = vmatmul.bf16.gmra.mxu0 %v108
    %v709 = vpop.f32.mrf.mxu0
    %v710 = vadd.f32 %v682, %v709
    %v711 = vpop.f32.mrf.mxu0
    %v712 = vadd.f32 %v684, %v711
    %713 = vmatmul.bf16.gmra.mxu0 %v111
    %v714 = vpop.f32.mrf.mxu0
    %v715 = vadd.f32 %v687, %v714
    %v716 = vpop.f32.mrf.mxu0
    %v717 = vadd.f32 %v689, %v716
    %718 = vmatmul.bf16.gmra.mxu0 %v114
    %v719 = vpop.f32.mrf.mxu0
    %v720 = vadd.f32 %v692, %v719
    %v721 = vpop.f32.mrf.mxu0
    %722 = vdwg.mxu0
    %723 = vmatpush.bf16.msra.mxu0 0
    %724 = vmatpush.bf16.msra.mxu0 0
    %725 = vmatpush.bf16.msra.mxu0 %v562
    %726 = vmatpush.bf16.msra.mxu0 %v558
    %727 = vmatpush.bf16.msra.mxu0 %v554
    %728 = vmatpush.bf16.msra.mxu0 %v550
    %729 = vmatpush.bf16.msra.mxu0 %v546
    %730 = vmatpush.bf16.msra.mxu0 %v542
    %731 = vmatmul.bf16.gmra.mxu0 %v656
    %v732 = vpop.f32.mrf.mxu0
    %v733 = vadd.f32 %v705, %v732
    %v734 = vpop.f32.mrf.mxu0
    %v735 = vadd.f32 %v707, %v734
    %736 = vmatmul.bf16.gmra.mxu0 %v659
    %v737 = vpop.f32.mrf.mxu0
    %v738 = vadd.f32 %v710, %v737
    %v739 = vpop.f32.mrf.mxu0
    %v740 = vadd.f32 %v712, %v739
    %741 = vmatmul.bf16.gmra.mxu0 %v662
    %v742 = vpop.f32.mrf.mxu0
    %v743 = vadd.f32 %v715, %v742
    %v744 = vpop.f32.mrf.mxu0
    %v745 = vadd.f32 %v717, %v744
    %746 = vmatmul.bf16.gmra.mxu0 %v665
    %v747 = vpop.f32.mrf.mxu0
    %v748 = vadd.f32 %v720, %v747
    %v749 = vpop.f32.mrf.mxu0
    %750 = vdwg.mxu0
    %751 = vmatpush.bf16.msra.mxu0 %v507
    %752 = vmatpush.bf16.msra.mxu0 %v503
    %753 = vmatpush.bf16.msra.mxu0 %v499
    %754 = vmatpush.bf16.msra.mxu0 %v495
    %755 = vmatpush.bf16.msra.mxu0 %v491
    %756 = vmatpush.bf16.msra.mxu0 %v487
    %757 = vmatpush.bf16.msra.mxu0 %v483
    %758 = vmatpush.bf16.msra.mxu0 %v479
    %759 = vmatmul.bf16.gmra.mxu0 %v104
    %v760 = vpop.f32.mrf.mxu0
    %v761 = vadd.f32 %v207, %v760
    %v762 = vpop.f32.mrf.mxu0
    %v763 = vadd.f32 %v207, %v762
    %764 = vmatmul.bf16.gmra.mxu0 %v107
    %v765 = vpop.f32.mrf.mxu0
    %v766 = vadd.f32 %v207, %v765
    %v767 = vpop.f32.mrf.mxu0
    %v768 = vadd.f32 %v207, %v767
    %769 = vmatmul.bf16.gmra.mxu0 %v110
    %v770 = vpop.f32.mrf.mxu0
    %v771 = vadd.f32 %v207, %v770
    %v772 = vpop.f32.mrf.mxu0
    %v773 = vadd.f32 %v207, %v772
    %774 = vmatmul.bf16.gmra.mxu0 %v113
    %v775 = vpop.f32.mrf.mxu0
    %v776 = vadd.f32 %v207, %v775
    %v777 = vpop.f32.mrf.mxu0
    %778 = vdwg.mxu0
    %779 = vmatpush.bf16.msra.mxu0 %v539
    %780 = vmatpush.bf16.msra.mxu0 %v535
    %781 = vmatpush.bf16.msra.mxu0 %v531
    %782 = vmatpush.bf16.msra.mxu0 %v527
    %783 = vmatpush.bf16.msra.mxu0 %v523
    %784 = vmatpush.bf16.msra.mxu0 %v519
    %785 = vmatpush.bf16.msra.mxu0 %v515
    %786 = vmatpush.bf16.msra.mxu0 %v511
    %787 = vmatmul.bf16.gmra.mxu0 %v105
    %v788 = vpop.f32.mrf.mxu0
    %v789 = vadd.f32 %v761, %v788
    %v790 = vpop.f32.mrf.mxu0
    %v791 = vadd.f32 %v763, %v790
    %792 = vmatmul.bf16.gmra.mxu0 %v108
    %v793 = vpop.f32.mrf.mxu0
    %v794 = vadd.f32 %v766, %v793
    %v795 = vpop.f32.mrf.mxu0
    %v796 = vadd.f32 %v768, %v795
    %797 = vmatmul.bf16.gmra.mxu0 %v111
    %v798 = vpop.f32.mrf.mxu0
    %v799 = vadd.f32 %v771, %v798
    %v800 = vpop.f32.mrf.mxu0
    %v801 = vadd.f32 %v773, %v800
    %802 = vmatmul.bf16.gmra.mxu0 %v114
    %v803 = vpop.f32.mrf.mxu0
    %v804 = vadd.f32 %v776, %v803
    %v805 = vpop.f32.mrf.mxu0
    %806 = vdwg.mxu0
    %807 = vmatpush.bf16.msra.mxu0 0
    %808 = vmatpush.bf16.msra.mxu0 0
    %809 = vmatpush.bf16.msra.mxu0 %v563
    %810 = vmatpush.bf16.msra.mxu0 %v559
    %811 = vmatpush.bf16.msra.mxu0 %v555
    %812 = vmatpush.bf16.msra.mxu0 %v551
    %813 = vmatpush.bf16.msra.mxu0 %v547
    %814 = vmatpush.bf16.msra.mxu0 %v543
    %815 = vmatmul.bf16.gmra.mxu0 %v656
    %v816 = vpop.f32.mrf.mxu0
    %v817 = vadd.f32 %v789, %v816
    %v818 = vpop.f32.mrf.mxu0
    %v819 = vadd.f32 %v791, %v818
    %820 = vmatmul.bf16.gmra.mxu0 %v659
    %v821 = vpop.f32.mrf.mxu0
    %v822 = vadd.f32 %v794, %v821
    %v823 = vpop.f32.mrf.mxu0
    %v824 = vadd.f32 %v796, %v823
    %825 = vmatmul.bf16.gmra.mxu0 %v662
    %v826 = vpop.f32.mrf.mxu0
    %v827 = vadd.f32 %v799, %v826
    %v828 = vpop.f32.mrf.mxu0
    %v829 = vadd.f32 %v801, %v828
    %830 = vmatmul.bf16.gmra.mxu0 %v665
    %v831 = vpop.f32.mrf.mxu0
    %v832 = vadd.f32 %v804, %v831
    %v833 = vpop.f32.mrf.mxu0
    %834 = vdwg.mxu0
    %835 = vmatpush.bf16.msra.mxu0 %v508
    %836 = vmatpush.bf16.msra.mxu0 %v504
    %837 = vmatpush.bf16.msra.mxu0 %v500
    %838 = vmatpush.bf16.msra.mxu0 %v496
    %839 = vmatpush.bf16.msra.mxu0 %v492
    %840 = vmatpush.bf16.msra.mxu0 %v488
    %841 = vmatpush.bf16.msra.mxu0 %v484
    %842 = vmatpush.bf16.msra.mxu0 %v480
    %843 = vmatmul.bf16.gmra.mxu0 %v104
    %v844 = vpop.f32.mrf.mxu0
    %v845 = vadd.f32 %v208, %v844
    %v846 = vpop.f32.mrf.mxu0
    %v847 = vadd.f32 %v208, %v846
    %848 = vmatmul.bf16.gmra.mxu0 %v107
    %v849 = vpop.f32.mrf.mxu0
    %v850 = vadd.f32 %v208, %v849
    %v851 = vpop.f32.mrf.mxu0
    %v852 = vadd.f32 %v208, %v851
    %853 = vmatmul.bf16.gmra.mxu0 %v110
    %v854 = vpop.f32.mrf.mxu0
    %v855 = vadd.f32 %v208, %v854
    %v856 = vpop.f32.mrf.mxu0
    %v857 = vadd.f32 %v208, %v856
    %858 = vmatmul.bf16.gmra.mxu0 %v113
    %v859 = vpop.f32.mrf.mxu0
    %v860 = vadd.f32 %v208, %v859
    %v861 = vpop.f32.mrf.mxu0
    %862 = vdwg.mxu0
    %863 = vmatpush.bf16.msra.mxu0 %v540
    %864 = vmatpush.bf16.msra.mxu0 %v536
    %865 = vmatpush.bf16.msra.mxu0 %v532
    %866 = vmatpush.bf16.msra.mxu0 %v528
    %867 = vmatpush.bf16.msra.mxu0 %v524
    %868 = vmatpush.bf16.msra.mxu0 %v520
    %869 = vmatpush.bf16.msra.mxu0 %v516
    %870 = vmatpush.bf16.msra.mxu0 %v512
    %871 = vmatmul.bf16.gmra.mxu0 %v105
    %v872 = vpop.f32.mrf.mxu0
    %v873 = vadd.f32 %v845, %v872
    %v874 = vpop.f32.mrf.mxu0
    %v875 = vadd.f32 %v847, %v874
    %876 = vmatmul.bf16.gmra.mxu0 %v108
    %v877 = vpop.f32.mrf.mxu0
    %v878 = vadd.f32 %v850, %v877
    %v879 = vpop.f32.mrf.mxu0
    %v880 = vadd.f32 %v852, %v879
    %881 = vmatmul.bf16.gmra.mxu0 %v111
    %v882 = vpop.f32.mrf.mxu0
    %v883 = vadd.f32 %v855, %v882
    %v884 = vpop.f32.mrf.mxu0
    %v885 = vadd.f32 %v857, %v884
    %886 = vmatmul.bf16.gmra.mxu0 %v114
    %v887 = vpop.f32.mrf.mxu0
    %v888 = vadd.f32 %v860, %v887
    %v889 = vpop.f32.mrf.mxu0
    %890 = vdwg.mxu0
    %891 = vmatpush.bf16.msra.mxu0 0
    %892 = vmatpush.bf16.msra.mxu0 0
    %893 = vmatpush.bf16.msra.mxu0 %v564
    %894 = vmatpush.bf16.msra.mxu0 %v560
    %895 = vmatpush.bf16.msra.mxu0 %v556
    %896 = vmatpush.bf16.msra.mxu0 %v552
    %897 = vmatpush.bf16.msra.mxu0 %v548
    %898 = vmatpush.bf16.msra.mxu0 %v544
    %899 = vmatmul.bf16.gmra.mxu0 %v656
    %v900 = vpop.f32.mrf.mxu0
    %v901 = vadd.f32 %v873, %v900
    %v902 = vpop.f32.mrf.mxu0
    %v903 = vadd.f32 %v875, %v902
    %904 = vmatmul.bf16.gmra.mxu0 %v659
    %v905 = vpop.f32.mrf.mxu0
    %v906 = vadd.f32 %v878, %v905
    %v907 = vpop.f32.mrf.mxu0
    %v908 = vadd.f32 %v880, %v907
    %909 = vmatmul.bf16.gmra.mxu0 %v662
    %v910 = vpop.f32.mrf.mxu0
    %v911 = vadd.f32 %v883, %v910
    %v912 = vpop.f32.mrf.mxu0
    %v913 = vadd.f32 %v885, %v912
    %914 = vmatmul.bf16.gmra.mxu0 %v665
    %v915 = vpop.f32.mrf.mxu0
    %v916 = vadd.f32 %v888, %v915
    %v917 = vpop.f32.mrf.mxu0
    %918 = vdwg.mxu0
    %919 = vmatpush.bf16.msra.mxu0 %v509
    %920 = vmatpush.bf16.msra.mxu0 %v505
    %921 = vmatpush.bf16.msra.mxu0 %v501
    %922 = vmatpush.bf16.msra.mxu0 %v497
    %923 = vmatpush.bf16.msra.mxu0 %v493
    %924 = vmatpush.bf16.msra.mxu0 %v489
    %925 = vmatpush.bf16.msra.mxu0 %v485
    %926 = vmatpush.bf16.msra.mxu0 %v481
    %927 = vmatmul.bf16.gmra.mxu0 %v104
    %v928 = vpop.f32.mrf.mxu0
    %v929 = vadd.f32 %v209, %v928
    %v930 = vpop.f32.mrf.mxu0
    %v931 = vadd.f32 %v209, %v930
    %932 = vmatmul.bf16.gmra.mxu0 %v107
    %v933 = vpop.f32.mrf.mxu0
    %v934 = vadd.f32 %v209, %v933
    %v935 = vpop.f32.mrf.mxu0
    %v936 = vadd.f32 %v209, %v935
    %937 = vmatmul.bf16.gmra.mxu0 %v110
    %v938 = vpop.f32.mrf.mxu0
    %v939 = vadd.f32 %v209, %v938
    %v940 = vpop.f32.mrf.mxu0
    %v941 = vadd.f32 %v209, %v940
    %942 = vmatmul.bf16.gmra.mxu0 %v113
    %v943 = vpop.f32.mrf.mxu0
    %v944 = vadd.f32 %v209, %v943
    %v945 = vpop.f32.mrf.mxu0
    %946 = vdwg.mxu0
    %947 = vmatpush.bf16.msra.mxu0 %v541
    %948 = vmatpush.bf16.msra.mxu0 %v537
    %949 = vmatpush.bf16.msra.mxu0 %v533
    %950 = vmatpush.bf16.msra.mxu0 %v529
    %951 = vmatpush.bf16.msra.mxu0 %v525
    %952 = vmatpush.bf16.msra.mxu0 %v521
    %953 = vmatpush.bf16.msra.mxu0 %v517
    %954 = vmatpush.bf16.msra.mxu0 %v513
    %955 = vmatmul.bf16.gmra.mxu0 %v105
    %v956 = vpop.f32.mrf.mxu0
    %v957 = vadd.f32 %v929, %v956
    %v958 = vpop.f32.mrf.mxu0
    %v959 = vadd.f32 %v931, %v958
    %960 = vmatmul.bf16.gmra.mxu0 %v108
    %v961 = vpop.f32.mrf.mxu0
    %v962 = vadd.f32 %v934, %v961
    %v963 = vpop.f32.mrf.mxu0
    %v964 = vadd.f32 %v936, %v963
    %965 = vmatmul.bf16.gmra.mxu0 %v111
    %v966 = vpop.f32.mrf.mxu0
    %v967 = vadd.f32 %v939, %v966
    %v968 = vpop.f32.mrf.mxu0
    %v969 = vadd.f32 %v941, %v968
    %970 = vmatmul.bf16.gmra.mxu0 %v114
    %v971 = vpop.f32.mrf.mxu0
    %v972 = vadd.f32 %v944, %v971
    %v973 = vpop.f32.mrf.mxu0
    %974 = vdwg.mxu0
    %975 = vmatpush.bf16.msra.mxu0 0
    %976 = vmatpush.bf16.msra.mxu0 0
    %977 = vmatpush.bf16.msra.mxu0 %v565
    %978 = vmatpush.bf16.msra.mxu0 %v561
    %979 = vmatpush.bf16.msra.mxu0 %v557
    %980 = vmatpush.bf16.msra.mxu0 %v553
    %981 = vmatpush.bf16.msra.mxu0 %v549
    %982 = vmatpush.bf16.msra.mxu0 %v545
    %983 = vmatmul.bf16.gmra.mxu0 %v656
    %v984 = vpop.f32.mrf.mxu0
    %v985 = vadd.f32 %v957, %v984
    %v986 = vpop.f32.mrf.mxu0
    %v987 = vadd.f32 %v959, %v986
    %988 = vmatmul.bf16.gmra.mxu0 %v659
    %v989 = vpop.f32.mrf.mxu0
    %v990 = vadd.f32 %v962, %v989
    %v991 = vpop.f32.mrf.mxu0
    %v992 = vadd.f32 %v964, %v991
    %993 = vmatmul.bf16.gmra.mxu0 %v662
    %v994 = vpop.f32.mrf.mxu0
    %v995 = vadd.f32 %v967, %v994
    %v996 = vpop.f32.mrf.mxu0
    %v997 = vadd.f32 %v969, %v996
    %998 = vmatmul.bf16.gmra.mxu0 %v665
    %v999 = vpop.f32.mrf.mxu0
    %v1000 = vadd.f32 %v972, %v999
    %v1001 = vpop.f32.mrf.mxu0
    %1002 = vdwg.mxu0
    %v1003 = vmax.f32 %v733, 0.0
    %v1004 = vmax.f32 %v817, 0.0
    %v1005 = vmax.f32 %v901, 0.0
    %v1006 = vmax.f32 %v985, 0.0
    %v1007 = vmax.f32 %v735, 0.0
    %v1008 = vmax.f32 %v819, 0.0
    %v1009 = vmax.f32 %v903, 0.0
    %v1010 = vmax.f32 %v987, 0.0
    %v1011 = vmax.f32 %v738, 0.0
    %v1012 = vmax.f32 %v822, 0.0
    %v1013 = vmax.f32 %v906, 0.0
    %v1014 = vmax.f32 %v990, 0.0
    %v1015 = vmax.f32 %v740, 0.0
    %v1016 = vmax.f32 %v824, 0.0
    %v1017 = vmax.f32 %v908, 0.0
    %v1018 = vmax.f32 %v992, 0.0
    %v1019 = vmax.f32 %v743, 0.0
    %v1020 = vmax.f32 %v827, 0.0
    %v1021 = vmax.f32 %v911, 0.0
    %v1022 = vmax.f32 %v995, 0.0
    %v1023 = vmax.f32 %v745, 0.0
    %v1024 = vmax.f32 %v829, 0.0
    %v1025 = vmax.f32 %v913, 0.0
    %v1026 = vmax.f32 %v997, 0.0
    %v1027 = vmax.f32 %v748, 0.0
    %v1028 = vmax.f32 %v832, 0.0
    %v1029 = vmax.f32 %v916, 0.0
    %v1030 = vmax.f32 %v1000, 0.0
    %v1031 = vpack.c.bf16 %v1007, %v1003
    %v1032 = vpack.c.bf16 %v1008, %v1004
    %v1033 = vpack.c.bf16 %v1009, %v1005
    %v1034 = vpack.c.bf16 %v1010, %v1006
    %v1035 = vpack.c.bf16 %v1015, %v1011
    %v1036 = vpack.c.bf16 %v1016, %v1012
    %v1037 = vpack.c.bf16 %v1017, %v1013
    %v1038 = vpack.c.bf16 %v1018, %v1014
    %v1039 = vpack.c.bf16 %v1023, %v1019
    %v1040 = vpack.c.bf16 %v1024, %v1020
    %v1041 = vpack.c.bf16 %v1025, %v1021
    %v1042 = vpack.c.bf16 %v1026, %v1022
    %v1043 = vpack.c.bf16 %v1027, %v1027
    %v1044 = vpack.c.bf16 %v1028, %v1028
    %v1045 = vpack.c.bf16 %v1029, %v1029
    %v1046 = vpack.c.bf16 %v1030, %v1030
    %v1047 = vld [vmem:[#allocation8] sm:$0xff]
    %v1048 = vld [vmem:[#allocation8 + $0x8] sm:$0xff]
    %v1049 = vld [vmem:[#allocation8 + $0x10] sm:$0xff]
    %v1050 = vld [vmem:[#allocation8 + $0x18] sm:$0xff]
    %v1051 = vld [vmem:[#allocation8 + $0x20] sm:$0xff]
    %v1052 = vld [vmem:[#allocation8 + $0x28] sm:$0xff]
    %v1053 = vld [vmem:[#allocation8 + $0x30] sm:$0xff]
    %v1054 = vld [vmem:[#allocation8 + $0x38] sm:$0xff]
    %v1055 = vld [vmem:[#allocation8 + $0x40] sm:$0xff]
    %v1056 = vld [vmem:[#allocation8 + $0x48] sm:$0xff]
    %v1057 = vld [vmem:[#allocation8 + $0x50] sm:$0xff]
    %v1058 = vld [vmem:[#allocation8 + $0x58] sm:$0xff]
    %v1059 = vld [vmem:[#allocation8 + $0x60] sm:$0xff]
    %v1060 = vld [vmem:[#allocation8 + $0x68] sm:$0xff]
    %v1061 = vld [vmem:[#allocation8 + $0x70] sm:$0xff]
    %v1062 = vld [vmem:[#allocation8 + $0x78] sm:$0xff]
    %v1063 = vld [vmem:[#allocation8 + $0x80] sm:$0xff]
    %v1064 = vld [vmem:[#allocation8 + $0x88] sm:$0xff]
    %v1065 = vld [vmem:[#allocation8 + $0x90] sm:$0xff]
    %v1066 = vld [vmem:[#allocation8 + $0x98] sm:$0xff]
    %v1067 = vld [vmem:[#allocation8 + $0xa0] sm:$0xff]
    %v1068 = vld [vmem:[#allocation8 + $0xa8] sm:$0xff]
    %v1069 = vld [vmem:[#allocation8 + $0xb0] sm:$0xff]
    %v1070 = vld [vmem:[#allocation8 + $0xb8] sm:$0xff]
    %v1071 = vld [vmem:[#allocation8 + $0xc0] sm:$0xff]
    %v1072 = vld [vmem:[#allocation8 + $0xc8] sm:$0xff]
    %v1073 = vld [vmem:[#allocation8 + $0xd0] sm:$0xff]
    %v1074 = vld [vmem:[#allocation8 + $0xd8] sm:$0xff]
    %v1075 = vld [vmem:[#allocation8 + $0xe0] sm:$0xff]
    %v1076 = vld [vmem:[#allocation8 + $0xe8] sm:$0xff]
    %v1077 = vld [vmem:[#allocation8 + $0xf0] sm:$0xff]
    %v1078 = vld [vmem:[#allocation8 + $0xf8] sm:$0xff]
    %v1079 = vld [vmem:[#allocation8 + $0x100] sm:$0xff]
    %v1080 = vld [vmem:[#allocation8 + $0x108] sm:$0xff]
    %v1081 = vld [vmem:[#allocation8 + $0x110] sm:$0xff]
    %v1082 = vld [vmem:[#allocation8 + $0x118] sm:$0xff]
    %v1083 = vld [vmem:[#allocation8 + $0x120] sm:$0xff]
    %v1084 = vld [vmem:[#allocation8 + $0x128] sm:$0xff]
    %v1085 = vld [vmem:[#allocation8 + $0x130] sm:$0xff]
    %v1086 = vld [vmem:[#allocation8 + $0x138] sm:$0xff]
    %v1087 = vld [vmem:[#allocation8 + $0x140] sm:$0xff]
    %v1088 = vld [vmem:[#allocation8 + $0x148] sm:$0xff]
    %v1089 = vld [vmem:[#allocation8 + $0x150] sm:$0xff]
    %v1090 = vld [vmem:[#allocation8 + $0x158] sm:$0xff]
    %v1091 = vld [vmem:[#allocation8 + $0x160] sm:$0xff]
    %v1092 = vld [vmem:[#allocation8 + $0x168] sm:$0xff]
    %v1093 = vld [vmem:[#allocation8 + $0x170] sm:$0xff]
    %v1094 = vld [vmem:[#allocation8 + $0x178] sm:$0xff]
    %v1095 = vld [vmem:[#allocation8 + $0x180] sm:$0xff]
    %v1096 = vld [vmem:[#allocation8 + $0x188] sm:$0xff]
    %v1097 = vld [vmem:[#allocation8 + $0x190] sm:$0xff]
    %v1098 = vld [vmem:[#allocation8 + $0x198] sm:$0xff]
    %v1099 = vld [vmem:[#allocation8 + $0x1a0] sm:$0xff]
    %v1100 = vld [vmem:[#allocation8 + $0x1a8] sm:$0xff]
    %v1101 = vld [vmem:[#allocation8 + $0x1b0] sm:$0xff]
    %v1102 = vld [vmem:[#allocation8 + $0x1b8] sm:$0xff]
    %v1103 = vld [vmem:[#allocation8 + $0x1c0] sm:$0xff]
    %v1104 = vld [vmem:[#allocation8 + $0x1c8] sm:$0xff]
    %v1105 = vld [vmem:[#allocation8 + $0x1d0] sm:$0xff]
    %v1106 = vld [vmem:[#allocation8 + $0x1d8] sm:$0xff]
    %v1107 = vld [vmem:[#allocation8 + $0x1e0] sm:$0xff]
    %v1108 = vld [vmem:[#allocation8 + $0x1e8] sm:$0xff]
    %v1109 = vld [vmem:[#allocation8 + $0x1f0] sm:$0xff]
    %v1110 = vld [vmem:[#allocation8 + $0x1f8] sm:$0xff]
    %v1111 = vld [vmem:[%s4] sm:$0x3]
    %v1113 = vperm.slane %v1111, 0
    %v1114 = vperm.slane %v1111, 1
    %v1181 = vunpack.c.l.b16 %v1047
    %v1182 = vunpack.c.h.b16 %v1047
    %v1183 = vunpack.c.l.b16 %v1048
    %v1184 = vunpack.c.h.b16 %v1048
    %v1185 = vunpack.c.l.b16 %v1049
    %v1186 = vunpack.c.h.b16 %v1049
    %v1187 = vunpack.c.l.b16 %v1050
    %v1188 = vunpack.c.h.b16 %v1050
    %v1189 = vunpack.c.l.b16 %v1051
    %v1190 = vunpack.c.h.b16 %v1051
    %v1191 = vunpack.c.l.b16 %v1052
    %v1192 = vunpack.c.h.b16 %v1052
    %v1193 = vunpack.c.l.b16 %v1053
    %v1194 = vunpack.c.h.b16 %v1053
    %v1195 = vunpack.c.l.b16 %v1054
    %v1196 = vunpack.c.h.b16 %v1054
    %v1197 = vunpack.c.l.b16 %v1055
    %v1198 = vunpack.c.h.b16 %v1055
    %v1199 = vunpack.c.l.b16 %v1056
    %v1200 = vunpack.c.h.b16 %v1056
    %v1201 = vunpack.c.l.b16 %v1057
    %v1202 = vunpack.c.h.b16 %v1057
    %v1203 = vunpack.c.l.b16 %v1058
    %v1204 = vunpack.c.h.b16 %v1058
    %v1205 = vunpack.c.l.b16 %v1059
    %v1206 = vunpack.c.h.b16 %v1059
    %v1207 = vunpack.c.l.b16 %v1060
    %v1208 = vunpack.c.h.b16 %v1060
    %v1209 = vunpack.c.l.b16 %v1061
    %v1210 = vunpack.c.h.b16 %v1061
    %v1211 = vunpack.c.l.b16 %v1062
    %v1212 = vunpack.c.h.b16 %v1062
    %v1213 = vunpack.c.l.b16 %v1063
    %v1214 = vunpack.c.h.b16 %v1063
    %v1215 = vunpack.c.l.b16 %v1064
    %v1216 = vunpack.c.h.b16 %v1064
    %v1217 = vunpack.c.l.b16 %v1065
    %v1218 = vunpack.c.h.b16 %v1065
    %v1219 = vunpack.c.l.b16 %v1066
    %v1220 = vunpack.c.h.b16 %v1066
    %v1221 = vunpack.c.l.b16 %v1067
    %v1222 = vunpack.c.h.b16 %v1067
    %v1223 = vunpack.c.l.b16 %v1068
    %v1224 = vunpack.c.h.b16 %v1068
    %v1225 = vunpack.c.l.b16 %v1069
    %v1226 = vunpack.c.h.b16 %v1069
    %v1227 = vunpack.c.l.b16 %v1070
    %v1228 = vunpack.c.h.b16 %v1070
    %v1229 = vunpack.c.l.b16 %v1071
    %v1230 = vunpack.c.h.b16 %v1071
    %v1231 = vunpack.c.l.b16 %v1072
    %v1232 = vunpack.c.h.b16 %v1072
    %v1233 = vunpack.c.l.b16 %v1073
    %v1234 = vunpack.c.h.b16 %v1073
    %v1235 = vunpack.c.l.b16 %v1074
    %v1236 = vunpack.c.h.b16 %v1074
    %v1237 = vunpack.c.l.b16 %v1075
    %v1238 = vunpack.c.h.b16 %v1075
    %v1239 = vunpack.c.l.b16 %v1076
    %v1240 = vunpack.c.h.b16 %v1076
    %v1241 = vunpack.c.l.b16 %v1077
    %v1242 = vunpack.c.h.b16 %v1077
    %v1243 = vunpack.c.l.b16 %v1078
    %v1244 = vunpack.c.h.b16 %v1078
    %v1245 = vunpack.c.l.b16 %v1079
    %v1246 = vunpack.c.h.b16 %v1079
    %v1247 = vunpack.c.l.b16 %v1080
    %v1248 = vunpack.c.h.b16 %v1080
    %v1249 = vunpack.c.l.b16 %v1081
    %v1250 = vunpack.c.h.b16 %v1081
    %v1251 = vunpack.c.l.b16 %v1082
    %v1252 = vunpack.c.h.b16 %v1082
    %v1253 = vunpack.c.l.b16 %v1083
    %v1254 = vunpack.c.h.b16 %v1083
    %v1255 = vunpack.c.l.b16 %v1084
    %v1256 = vunpack.c.h.b16 %v1084
    %v1257 = vunpack.c.l.b16 %v1085
    %v1258 = vunpack.c.h.b16 %v1085
    %v1259 = vunpack.c.l.b16 %v1086
    %v1260 = vunpack.c.h.b16 %v1086
    %v1261 = vunpack.c.l.b16 %v1087
    %v1262 = vunpack.c.h.b16 %v1087
    %v1263 = vunpack.c.l.b16 %v1088
    %v1264 = vunpack.c.h.b16 %v1088
    %v1265 = vunpack.c.l.b16 %v1089
    %v1266 = vunpack.c.h.b16 %v1089
    %v1267 = vunpack.c.l.b16 %v1090
    %v1268 = vunpack.c.h.b16 %v1090
    %v1269 = vunpack.c.l.b16 %v1091
    %v1270 = vunpack.c.h.b16 %v1091
    %v1271 = vunpack.c.l.b16 %v1092
    %v1272 = vunpack.c.h.b16 %v1092
    %v1273 = vunpack.c.l.b16 %v1093
    %v1274 = vunpack.c.h.b16 %v1093
    %v1275 = vunpack.c.l.b16 %v1094
    %v1276 = vunpack.c.h.b16 %v1094
    %v1277 = vunpack.c.l.b16 %v1095
    %v1278 = vunpack.c.h.b16 %v1095
    %v1279 = vunpack.c.l.b16 %v1096
    %v1280 = vunpack.c.h.b16 %v1096
    %v1281 = vunpack.c.l.b16 %v1097
    %v1282 = vunpack.c.h.b16 %v1097
    %v1283 = vunpack.c.l.b16 %v1098
    %v1284 = vunpack.c.h.b16 %v1098
    %v1285 = vunpack.c.l.b16 %v1099
    %v1286 = vunpack.c.h.b16 %v1099
    %v1287 = vunpack.c.l.b16 %v1100
    %v1288 = vunpack.c.h.b16 %v1100
    %v1289 = vunpack.c.l.b16 %v1101
    %v1290 = vunpack.c.h.b16 %v1101
    %v1291 = vunpack.c.l.b16 %v1102
    %v1292 = vunpack.c.h.b16 %v1102
    %v1293 = vunpack.c.l.b16 %v1103
    %v1294 = vunpack.c.h.b16 %v1103
    %v1295 = vunpack.c.l.b16 %v1104
    %v1296 = vunpack.c.h.b16 %v1104
    %v1297 = vunpack.c.l.b16 %v1105
    %v1298 = vunpack.c.h.b16 %v1105
    %v1299 = vunpack.c.l.b16 %v1106
    %v1300 = vunpack.c.h.b16 %v1106
    %v1301 = vunpack.c.l.b16 %v1107
    %v1302 = vunpack.c.h.b16 %v1107
    %v1303 = vunpack.c.l.b16 %v1108
    %v1304 = vunpack.c.h.b16 %v1108
    %v1305 = vunpack.c.l.b16 %v1109
    %v1306 = vunpack.c.h.b16 %v1109
    %v1307 = vunpack.c.l.b16 %v1110
    %v1308 = vunpack.c.h.b16 %v1110
    %v1309 = vpack.c.b16 %v1183, %v1181
    %v1310 = vpack.c.b16 %v1184, %v1182
    %v1311 = vpack.c.b16 %v1187, %v1185
    %v1312 = vpack.c.b16 %v1188, %v1186
    %v1313 = vpack.c.b16 %v1191, %v1189
    %v1314 = vpack.c.b16 %v1192, %v1190
    %v1315 = vpack.c.b16 %v1195, %v1193
    %v1316 = vpack.c.b16 %v1196, %v1194
    %v1317 = vpack.c.b16 %v1199, %v1197
    %v1318 = vpack.c.b16 %v1200, %v1198
    %v1319 = vpack.c.b16 %v1203, %v1201
    %v1320 = vpack.c.b16 %v1204, %v1202
    %v1321 = vpack.c.b16 %v1207, %v1205
    %v1322 = vpack.c.b16 %v1208, %v1206
    %v1323 = vpack.c.b16 %v1211, %v1209
    %v1324 = vpack.c.b16 %v1212, %v1210
    %v1325 = vpack.c.b16 %v1215, %v1213
    %v1326 = vpack.c.b16 %v1216, %v1214
    %v1327 = vpack.c.b16 %v1219, %v1217
    %v1328 = vpack.c.b16 %v1220, %v1218
    %v1329 = vpack.c.b16 %v1223, %v1221
    %v1330 = vpack.c.b16 %v1224, %v1222
    %v1331 = vpack.c.b16 %v1227, %v1225
    %v1332 = vpack.c.b16 %v1228, %v1226
    %v1333 = vpack.c.b16 %v1231, %v1229
    %v1334 = vpack.c.b16 %v1232, %v1230
    %v1335 = vpack.c.b16 %v1235, %v1233
    %v1336 = vpack.c.b16 %v1236, %v1234
    %v1337 = vpack.c.b16 %v1239, %v1237
    %v1338 = vpack.c.b16 %v1240, %v1238
    %v1339 = vpack.c.b16 %v1243, %v1241
    %v1340 = vpack.c.b16 %v1244, %v1242
    %v1341 = vpack.c.b16 %v1247, %v1245
    %v1342 = vpack.c.b16 %v1248, %v1246
    %v1343 = vpack.c.b16 %v1251, %v1249
    %v1344 = vpack.c.b16 %v1252, %v1250
    %v1345 = vpack.c.b16 %v1255, %v1253
    %v1346 = vpack.c.b16 %v1256, %v1254
    %v1347 = vpack.c.b16 %v1259, %v1257
    %v1348 = vpack.c.b16 %v1260, %v1258
    %v1349 = vpack.c.b16 %v1263, %v1261
    %v1350 = vpack.c.b16 %v1264, %v1262
    %v1351 = vpack.c.b16 %v1267, %v1265
    %v1352 = vpack.c.b16 %v1268, %v1266
    %v1353 = vpack.c.b16 %v1271, %v1269
    %v1354 = vpack.c.b16 %v1272, %v1270
    %v1355 = vpack.c.b16 %v1275, %v1273
    %v1356 = vpack.c.b16 %v1276, %v1274
    %v1357 = vpack.c.b16 %v1279, %v1277
    %v1358 = vpack.c.b16 %v1280, %v1278
    %v1359 = vpack.c.b16 %v1283, %v1281
    %v1360 = vpack.c.b16 %v1284, %v1282
    %v1361 = vpack.c.b16 %v1287, %v1285
    %v1362 = vpack.c.b16 %v1288, %v1286
    %v1363 = vpack.c.b16 %v1291, %v1289
    %v1364 = vpack.c.b16 %v1292, %v1290
    %v1365 = vpack.c.b16 %v1295, %v1293
    %v1366 = vpack.c.b16 %v1296, %v1294
    %v1367 = vpack.c.b16 %v1299, %v1297
    %v1368 = vpack.c.b16 %v1300, %v1298
    %v1369 = vpack.c.b16 %v1303, %v1301
    %v1370 = vpack.c.b16 %v1304, %v1302
    %v1371 = vpack.c.b16 %v1307, %v1305
    %v1372 = vpack.c.b16 %v1308, %v1306
    %1437 = vmatpush.bf16.msra.mxu0 %v1323
    %1438 = vmatpush.bf16.msra.mxu0 %v1321
    %1439 = vmatpush.bf16.msra.mxu0 %v1319
    %1440 = vmatpush.bf16.msra.mxu0 %v1317
    %1441 = vmatpush.bf16.msra.mxu0 %v1315
    %1442 = vmatpush.bf16.msra.mxu0 %v1313
    %1443 = vmatpush.bf16.msra.mxu0 %v1311
    %1444 = vmatpush.bf16.msra.mxu0 %v1309
    %1445 = vmatmul.bf16.gmra.mxu0 %v1031
    %v1446 = vpop.f32.mrf.mxu0
    %v1447 = vadd.f32 %v1113, %v1446
    %v1448 = vpop.f32.mrf.mxu0
    %v1449 = vadd.f32 %v1113, %v1448
    %1450 = vmatmul.bf16.gmra.mxu0 %v1035
    %v1451 = vpop.f32.mrf.mxu0
    %v1452 = vadd.f32 %v1113, %v1451
    %v1453 = vpop.f32.mrf.mxu0
    %v1454 = vadd.f32 %v1113, %v1453
    %1455 = vmatmul.bf16.gmra.mxu0 %v1039
    %v1456 = vpop.f32.mrf.mxu0
    %v1457 = vadd.f32 %v1113, %v1456
    %v1458 = vpop.f32.mrf.mxu0
    %v1459 = vadd.f32 %v1113, %v1458
    %1460 = vmatmul.bf16.gmra.mxu0 %v1043
    %v1461 = vpop.f32.mrf.mxu0
    %v1462 = vadd.f32 %v1113, %v1461
    %v1463 = vpop.f32.mrf.mxu0
    %1464 = vdwg.mxu0
    %1465 = vmatpush.bf16.msra.mxu0 %v1339
    %1466 = vmatpush.bf16.msra.mxu0 %v1337
    %1467 = vmatpush.bf16.msra.mxu0 %v1335
    %1468 = vmatpush.bf16.msra.mxu0 %v1333
    %1469 = vmatpush.bf16.msra.mxu0 %v1331
    %1470 = vmatpush.bf16.msra.mxu0 %v1329
    %1471 = vmatpush.bf16.msra.mxu0 %v1327
    %1472 = vmatpush.bf16.msra.mxu0 %v1325
    %1473 = vmatmul.bf16.gmra.mxu0 %v1032
    %v1474 = vpop.f32.mrf.mxu0
    %v1475 = vadd.f32 %v1447, %v1474
    %v1476 = vpop.f32.mrf.mxu0
    %v1477 = vadd.f32 %v1449, %v1476
    %1478 = vmatmul.bf16.gmra.mxu0 %v1036
    %v1479 = vpop.f32.mrf.mxu0
    %v1480 = vadd.f32 %v1452, %v1479
    %v1481 = vpop.f32.mrf.mxu0
    %v1482 = vadd.f32 %v1454, %v1481
    %1483 = vmatmul.bf16.gmra.mxu0 %v1040
    %v1484 = vpop.f32.mrf.mxu0
    %v1485 = vadd.f32 %v1457, %v1484
    %v1486 = vpop.f32.mrf.mxu0
    %v1487 = vadd.f32 %v1459, %v1486
    %1488 = vmatmul.bf16.gmra.mxu0 %v1044
    %v1489 = vpop.f32.mrf.mxu0
    %v1490 = vadd.f32 %v1462, %v1489
    %v1491 = vpop.f32.mrf.mxu0
    %1492 = vdwg.mxu0
    %1493 = vmatpush.bf16.msra.mxu0 %v1355
    %1494 = vmatpush.bf16.msra.mxu0 %v1353
    %1495 = vmatpush.bf16.msra.mxu0 %v1351
    %1496 = vmatpush.bf16.msra.mxu0 %v1349
    %1497 = vmatpush.bf16.msra.mxu0 %v1347
    %1498 = vmatpush.bf16.msra.mxu0 %v1345
    %1499 = vmatpush.bf16.msra.mxu0 %v1343
    %1500 = vmatpush.bf16.msra.mxu0 %v1341
    %1501 = vmatmul.bf16.gmra.mxu0 %v1033
    %v1502 = vpop.f32.mrf.mxu0
    %v1503 = vadd.f32 %v1475, %v1502
    %v1504 = vpop.f32.mrf.mxu0
    %v1505 = vadd.f32 %v1477, %v1504
    %1506 = vmatmul.bf16.gmra.mxu0 %v1037
    %v1507 = vpop.f32.mrf.mxu0
    %v1508 = vadd.f32 %v1480, %v1507
    %v1509 = vpop.f32.mrf.mxu0
    %v1510 = vadd.f32 %v1482, %v1509
    %1511 = vmatmul.bf16.gmra.mxu0 %v1041
    %v1512 = vpop.f32.mrf.mxu0
    %v1513 = vadd.f32 %v1485, %v1512
    %v1514 = vpop.f32.mrf.mxu0
    %v1515 = vadd.f32 %v1487, %v1514
    %1516 = vmatmul.bf16.gmra.mxu0 %v1045
    %v1517 = vpop.f32.mrf.mxu0
    %v1518 = vadd.f32 %v1490, %v1517
    %v1519 = vpop.f32.mrf.mxu0
    %1520 = vdwg.mxu0
    %1521 = vmatpush.bf16.msra.mxu0 %v1371
    %1522 = vmatpush.bf16.msra.mxu0 %v1369
    %1523 = vmatpush.bf16.msra.mxu0 %v1367
    %1524 = vmatpush.bf16.msra.mxu0 %v1365
    %1525 = vmatpush.bf16.msra.mxu0 %v1363
    %1526 = vmatpush.bf16.msra.mxu0 %v1361
    %1527 = vmatpush.bf16.msra.mxu0 %v1359
    %1528 = vmatpush.bf16.msra.mxu0 %v1357
    %1529 = vmatmul.bf16.gmra.mxu0 %v1034
    %v1530 = vpop.f32.mrf.mxu0
    %v1531 = vadd.f32 %v1503, %v1530
    %v1532 = vpop.f32.mrf.mxu0
    %v1533 = vadd.f32 %v1505, %v1532
    %1534 = vmatmul.bf16.gmra.mxu0 %v1038
    %v1535 = vpop.f32.mrf.mxu0
    %v1536 = vadd.f32 %v1508, %v1535
    %v1537 = vpop.f32.mrf.mxu0
    %v1538 = vadd.f32 %v1510, %v1537
    %1539 = vmatmul.bf16.gmra.mxu0 %v1042
    %v1540 = vpop.f32.mrf.mxu0
    %v1541 = vadd.f32 %v1513, %v1540
    %v1542 = vpop.f32.mrf.mxu0
    %v1543 = vadd.f32 %v1515, %v1542
    %1544 = vmatmul.bf16.gmra.mxu0 %v1046
    %v1545 = vpop.f32.mrf.mxu0
    %v1546 = vadd.f32 %v1518, %v1545
    %v1547 = vpop.f32.mrf.mxu0
    %1548 = vdwg.mxu0
    %1549 = vmatpush.bf16.msra.mxu0 %v1324
    %1550 = vmatpush.bf16.msra.mxu0 %v1322
    %1551 = vmatpush.bf16.msra.mxu0 %v1320
    %1552 = vmatpush.bf16.msra.mxu0 %v1318
    %1553 = vmatpush.bf16.msra.mxu0 %v1316
    %1554 = vmatpush.bf16.msra.mxu0 %v1314
    %1555 = vmatpush.bf16.msra.mxu0 %v1312
    %1556 = vmatpush.bf16.msra.mxu0 %v1310
    %1557 = vmatmul.bf16.gmra.mxu0 %v1031
    %v1558 = vpop.f32.mrf.mxu0
    %v1559 = vadd.f32 %v1114, %v1558
    %v1560 = vpop.f32.mrf.mxu0
    %v1561 = vadd.f32 %v1114, %v1560
    %1562 = vmatmul.bf16.gmra.mxu0 %v1035
    %v1563 = vpop.f32.mrf.mxu0
    %v1564 = vadd.f32 %v1114, %v1563
    %v1565 = vpop.f32.mrf.mxu0
    %v1566 = vadd.f32 %v1114, %v1565
    %1567 = vmatmul.bf16.gmra.mxu0 %v1039
    %v1568 = vpop.f32.mrf.mxu0
    %v1569 = vadd.f32 %v1114, %v1568
    %v1570 = vpop.f32.mrf.mxu0
    %v1571 = vadd.f32 %v1114, %v1570
    %1572 = vmatmul.bf16.gmra.mxu0 %v1043
    %v1573 = vpop.f32.mrf.mxu0
    %v1574 = vadd.f32 %v1114, %v1573
    %v1575 = vpop.f32.mrf.mxu0
    %1576 = vdwg.mxu0
    %1577 = vmatpush.bf16.msra.mxu0 %v1340
    %1578 = vmatpush.bf16.msra.mxu0 %v1338
    %1579 = vmatpush.bf16.msra.mxu0 %v1336
    %1580 = vmatpush.bf16.msra.mxu0 %v1334
    %1581 = vmatpush.bf16.msra.mxu0 %v1332
    %1582 = vmatpush.bf16.msra.mxu0 %v1330
    %1583 = vmatpush.bf16.msra.mxu0 %v1328
    %1584 = vmatpush.bf16.msra.mxu0 %v1326
    %1585 = vmatmul.bf16.gmra.mxu0 %v1032
    %v1586 = vpop.f32.mrf.mxu0
    %v1587 = vadd.f32 %v1559, %v1586
    %v1588 = vpop.f32.mrf.mxu0
    %v1589 = vadd.f32 %v1561, %v1588
    %1590 = vmatmul.bf16.gmra.mxu0 %v1036
    %v1591 = vpop.f32.mrf.mxu0
    %v1592 = vadd.f32 %v1564, %v1591
    %v1593 = vpop.f32.mrf.mxu0
    %v1594 = vadd.f32 %v1566, %v1593
    %1595 = vmatmul.bf16.gmra.mxu0 %v1040
    %v1596 = vpop.f32.mrf.mxu0
    %v1597 = vadd.f32 %v1569, %v1596
    %v1598 = vpop.f32.mrf.mxu0
    %v1599 = vadd.f32 %v1571, %v1598
    %1600 = vmatmul.bf16.gmra.mxu0 %v1044
    %v1601 = vpop.f32.mrf.mxu0
    %v1602 = vadd.f32 %v1574, %v1601
    %v1603 = vpop.f32.mrf.mxu0
    %1604 = vdwg.mxu0
    %1605 = vmatpush.bf16.msra.mxu0 %v1356
    %1606 = vmatpush.bf16.msra.mxu0 %v1354
    %1607 = vmatpush.bf16.msra.mxu0 %v1352
    %1608 = vmatpush.bf16.msra.mxu0 %v1350
    %1609 = vmatpush.bf16.msra.mxu0 %v1348
    %1610 = vmatpush.bf16.msra.mxu0 %v1346
    %1611 = vmatpush.bf16.msra.mxu0 %v1344
    %1612 = vmatpush.bf16.msra.mxu0 %v1342
    %1613 = vmatmul.bf16.gmra.mxu0 %v1033
    %v1614 = vpop.f32.mrf.mxu0
    %v1615 = vadd.f32 %v1587, %v1614
    %v1616 = vpop.f32.mrf.mxu0
    %v1617 = vadd.f32 %v1589, %v1616
    %1618 = vmatmul.bf16.gmra.mxu0 %v1037
    %v1619 = vpop.f32.mrf.mxu0
    %v1620 = vadd.f32 %v1592, %v1619
    %v1621 = vpop.f32.mrf.mxu0
    %v1622 = vadd.f32 %v1594, %v1621
    %1623 = vmatmul.bf16.gmra.mxu0 %v1041
    %v1624 = vpop.f32.mrf.mxu0
    %v1625 = vadd.f32 %v1597, %v1624
    %v1626 = vpop.f32.mrf.mxu0
    %v1627 = vadd.f32 %v1599, %v1626
    %1628 = vmatmul.bf16.gmra.mxu0 %v1045
    %v1629 = vpop.f32.mrf.mxu0
    %v1630 = vadd.f32 %v1602, %v1629
    %v1631 = vpop.f32.mrf.mxu0
    %1632 = vdwg.mxu0
    %1633 = vmatpush.bf16.msra.mxu0 %v1372
    %1634 = vmatpush.bf16.msra.mxu0 %v1370
    %1635 = vmatpush.bf16.msra.mxu0 %v1368
    %1636 = vmatpush.bf16.msra.mxu0 %v1366
    %1637 = vmatpush.bf16.msra.mxu0 %v1364
    %1638 = vmatpush.bf16.msra.mxu0 %v1362
    %1639 = vmatpush.bf16.msra.mxu0 %v1360
    %1640 = vmatpush.bf16.msra.mxu0 %v1358
    %1641 = vmatmul.bf16.gmra.mxu0 %v1034
    %v1642 = vpop.f32.mrf.mxu0
    %v1643 = vadd.f32 %v1615, %v1642
    %v1644 = vpop.f32.mrf.mxu0
    %v1645 = vadd.f32 %v1617, %v1644
    %1646 = vmatmul.bf16.gmra.mxu0 %v1038
    %v1647 = vpop.f32.mrf.mxu0
    %v1648 = vadd.f32 %v1620, %v1647
    %v1649 = vpop.f32.mrf.mxu0
    %v1650 = vadd.f32 %v1622, %v1649
    %1651 = vmatmul.bf16.gmra.mxu0 %v1042
    %v1652 = vpop.f32.mrf.mxu0
    %v1653 = vadd.f32 %v1625, %v1652
    %v1654 = vpop.f32.mrf.mxu0
    %v1655 = vadd.f32 %v1627, %v1654
    %1656 = vmatmul.bf16.gmra.mxu0 %v1046
    %v1657 = vpop.f32.mrf.mxu0
    %v1658 = vadd.f32 %v1630, %v1657
    %v1659 = vpop.f32.mrf.mxu0
    %1660 = vdwg.mxu0
    %v1661 = vmax.f32 %v1531, 0.0
    %v1662 = vmax.f32 %v1643, 0.0
    %v1663 = vmax.f32 %v1533, 0.0
    %v1664 = vmax.f32 %v1645, 0.0
    %v1665 = vmax.f32 %v1536, 0.0
    %v1666 = vmax.f32 %v1648, 0.0
    %v1667 = vmax.f32 %v1538, 0.0
    %v1668 = vmax.f32 %v1650, 0.0
    %v1669 = vmax.f32 %v1541, 0.0
    %v1670 = vmax.f32 %v1653, 0.0
    %v1671 = vmax.f32 %v1543, 0.0
    %v1672 = vmax.f32 %v1655, 0.0
    %v1673 = vmax.f32 %v1546, 0.0
    %v1674 = vmax.f32 %v1658, 0.0
    %1675 = vst [vmem:[#allocation10] sm:$0xff] %v1661
    %1676 = vst [vmem:[#allocation10 + $0x8] sm:$0xff] %v1662
    %1677 = vst [vmem:[#allocation10 + $0x10] sm:$0xff] %v1663
    %1678 = vst [vmem:[#allocation10 + $0x18] sm:$0xff] %v1664
    %1679 = vst [vmem:[#allocation10 + $0x20] sm:$0xff] %v1665
    %1680 = vst [vmem:[#allocation10 + $0x28] sm:$0xff] %v1666
    %1681 = vst [vmem:[#allocation10 + $0x30] sm:$0xff] %v1667
    %1682 = vst [vmem:[#allocation10 + $0x38] sm:$0xff] %v1668
    %1683 = vst [vmem:[#allocation10 + $0x40] sm:$0xff] %v1669
    %1684 = vst [vmem:[#allocation10 + $0x48] sm:$0xff] %v1670
    %1685 = vst [vmem:[#allocation10 + $0x50] sm:$0xff] %v1671
    %1686 = vst [vmem:[#allocation10 + $0x58] sm:$0xff] %v1672
    %1687 = vst [vmem:[#allocation10 + $0x60] sm:$0xff] %v1673
    %1688 = vst [vmem:[#allocation10 + $0x68] sm:$0xff] %v1674
    // Predicated region
    $region38: #{tpu_custom_call.1} parent=1 // pred_check
      _
    $region39: #{tpu_custom_call.1} parent=1 // pred_check_branch
      %1690 = sbr.rel (0) target = $region41
    $region40: #{tpu_custom_call.1} parent=1 // pred_region
      %1692 = vsyncadd [#allocation4], 0
      %s1693 = sshll.u32 [#allocation10], 4
      %s1694 = int_to_ptr.vmem [resolvable:$true] %s1693
      %s1695 = sshll.u32 %s5, 4
      %s1696 = int_to_ptr.hbm [resolvable:$true] %s1695
      %1701 = dma.vmem_to_hbm [thread:$0]  %s1694, 1792, %s1696, [#allocation4], 256, 256, 16
    $region41: #{tpu_custom_call.1} parent=1 // pred_fallthru
      _
    // Predicated region
    $region42: #{tpu_custom_call.1} parent=1 // pred_check
      _
    $region43: #{tpu_custom_call.1} parent=1 // pred_check_branch
      %1703 = sbr.rel (0) target = $region45
    $region44: #{tpu_custom_call.1} parent=1 // pred_region
      %1705 = dma.done [#allocation4], 1792
    $region45: #{tpu_custom_call.1} parent=1 // pred_fallthru
      _
    %1706 = vsyncpa [#allocation3], 1
    %1707 = vsyncpa [#allocation6], 1
    %1708 = vsyncpa [#allocation9], 1
    %1709 = vsyncpa [#allocation4], 1

</llo_original>
